<compile_context>
chip_gen: v5e
topology: v5e:2x2
jax: 0.10.0
libtpu: 0.0.40
codegen_flags: <defaults>
</compile_context>

<pallas_src>
import jax
import jax.numpy as jnp
import numpy as np
from jax.experimental import pallas as pl
from jax.experimental.pallas import tpu as pltpu  # noqa: F401  (kept for TPU-specific extensions)

# ---- values taken from the repo's `const` module (chosen deterministically here) ----
NUM_RNN_LAYERS = 2
BARPOS_DIM = 16
BARPOS_EMBED_DIM = 8

# ---- small model hyper-parameters consistent with the module ----
VOCAB_SIZE = 48
EMBED_DIM = 16
COND_VOCAB_SIZE = 12
COND_EMBED_DIM = 8
OUTPUT_DIM = 48
HIDDEN_DIM = 32
SEQ_LEN = 8
BATCH = 4
MID_DIM = (HIDDEN_DIM + OUTPUT_DIM) // 2                    # 40
MID_PAD = 64                                                # lane-padded mid dim
ENC_IN = EMBED_DIM + COND_EMBED_DIM + BARPOS_EMBED_DIM      # 32
BN_EPS = 1e-5

BATCH_PAD = ((BATCH + 7) // 8) * 8                          # 8: full sublane tiles
ROWS = SEQ_LEN * BATCH_PAD                                  # 64 time-major flat rows

# ---- fused embedding/encoder table layout (K = 128 lanes = one MXU K-tile) ----
X_OFF = 0
C_OFF = VOCAB_SIZE                                          # 48
B_OFF = VOCAB_SIZE + COND_VOCAB_SIZE                        # 60
BIAS_LANE = B_OFF + BARPOS_DIM                              # 76: always-hot lane -> adds b_enc
TABLE_K = 128

# ---- LSTM weight slab layout: per layer rows [0:H)=W_ih, [H:2H)=W_hh, row 2H = bias ----
LSTM_ROWS = 72                                              # 2H+1 padded up to multiple of 8

# ---- decoder slab layout (rows x MID_PAD lanes), all row offsets 8-aligned ----
D_WD1 = 0                                                   # rows [0:32)    W_dec1 (H x MID_PAD)
D_BD1 = HIDDEN_DIM                                          # row 32         b_dec1
D_WD2 = 40                                                  # rows [40:104)  W_dec2 (MID_PAD x OUT)
D_BD2 = D_WD2 + MID_PAD                                     # row 104        b_dec2
DEC_ROWS = 112


# ---------------------------------------------------------------------------
# Fused kernel: multi-hot encoder -> 2-layer LSTM (layer-split) -> decoder -> log-softmax
# ---------------------------------------------------------------------------
def _fused_kernel(tok_ref, table_ref, bn_ref, lstm_ref, dec_ref, out_ref):
    f32 = jnp.float32
    H = HIDDEN_DIM
    B = BATCH_PAD
    T = SEQ_LEN

    # -------- embeddings + concat + encoder Linear + bias: ONE multi-hot MXU matmul ----
    tok = tok_ref[...]                                       # (ROWS, 3) int32, offsets pre-added
    ids = jax.lax.broadcasted_iota(jnp.int32, (ROWS, TABLE_K), 1)
    mh = ((ids == tok[:, 0:1]) | (ids == tok[:, 1:2]) |
          (ids == tok[:, 2:3]) | (ids == BIAS_LANE)).astype(f32)
    pre = jnp.dot(mh, table_ref[...], preferred_element_type=f32)        # (ROWS, H)

    bn = bn_ref[...]                                         # (ROWS, 4) per-row BN scale/shift
    esc, esh = bn[:, 0:1], bn[:, 1:2]
    dsc, dsh = bn[:, 2:3], bn[:, 3:4]
    enc = jnp.maximum(pre * esc + esh, 0.0)                  # encode_bn (eval) + ReLU

    # -------- 2-layer LSTM, layer-split: input projection hoisted as one M=ROWS matmul --
    def cell(gates, c_prev):
        sg = jax.nn.sigmoid(gates)        # one EUP pass over the full (B, 4H) tile
        tg = jnp.tanh(gates)              # one EUP pass over the full (B, 4H) tile
        i_g = sg[:, 0 * H:1 * H]
        f_g = sg[:, 1 * H:2 * H]
        g_g = tg[:, 2 * H:3 * H]
        o_g = sg[:, 3 * H:4 * H]
        c_new = f_g * c_prev + i_g * g_g
        h_new = o_g * jnp.tanh(c_new)
        return h_new, c_new

    def run_layer(x_all, layer):
        wih = lstm_ref[layer, 0:H, :]                        # (H, 4H)
        whh = lstm_ref[layer, H:2 * H, :]                    # (H, 4H)
        b = lstm_ref[layer, 2 * H:2 * H + 1, :]              # (1, 4H) combined b_ih + b_hh
        # input projection for ALL timesteps at once, off the serial chain
        g_all = jnp.dot(x_all, wih, preferred_element_type=f32) + b     # (ROWS, 4H)
        c = jnp.zeros((B, H), f32)
        h = jnp.zeros((B, H), f32)
        hs = []
        for t in range(T):                                   # fully unrolled recurrence
            g = g_all[t * B:(t + 1) * B, :]
            if t > 0:                                        # h == 0 at t=0: skip dead matmul
                g = g + jnp.dot(h, whh, preferred_element_type=f32)
            h, c = cell(g, c)
            hs.append(h)
        return jnp.concatenate(hs, axis=0)                   # (ROWS, H), stays in vregs

    h0_all = run_layer(enc, 0)
    lstm_out = run_layer(h0_all, 1)
    # TODO(synk): training-mode inter-layer dropout omitted (eval semantics).

    # -------- decoder: single M=ROWS matmuls, lane-padded mid dim, log-softmax ---------
    wd1 = dec_ref[D_WD1:D_WD1 + H, :]                        # (H, MID_PAD)
    bd1 = dec_ref[D_BD1:D_BD1 + 1, :]                        # (1, MID_PAD)
    wd2 = dec_ref[D_WD2:D_WD2 + MID_PAD, 0:OUTPUT_DIM]       # (MID_PAD, OUT), rows >= MID_DIM are 0
    bd2 = dec_ref[D_BD2:D_BD2 + 1, 0:OUTPUT_DIM]             # (1, OUT)

    d1 = jnp.dot(lstm_out, wd1, preferred_element_type=f32) + bd1
    d1 = jnp.maximum(d1 * dsc + dsh, 0.0)                    # decode_bn (eval) + ReLU
    d2 = jnp.dot(d1, wd2, preferred_element_type=f32) + bd2
    m = jnp.max(d2, axis=-1, keepdims=True)
    lse = m + jnp.log(jnp.sum(jnp.exp(d2 - m), axis=-1, keepdims=True))
    out_ref[...] = d2 - lse


# ---------------------------------------------------------------------------
# Wrapper: weight prep + single pallas_call (5 packed operands)
# ---------------------------------------------------------------------------
def _bn_scale_shift(gamma, beta, mean, var, eps=BN_EPS):
    scale = gamma / jnp.sqrt(var + eps)
    shift = beta - mean * scale
    return scale.astype(jnp.float32), shift.astype(jnp.float32)          # (T,)


def _per_row(vec_t):
    # (T,) per-timestep value -> (ROWS,) for time-major flat rows r = t*BATCH_PAD + b
    return jnp.repeat(vec_t.astype(jnp.float32), BATCH_PAD)


def _flat_tokens(tok, offset):
    # (B, T) -> pad batch to BATCH_PAD -> time-major flat (ROWS,) int32, table offset pre-added
    padded = jnp.zeros((BATCH_PAD, SEQ_LEN), jnp.int32).at[:tok.shape[0]].set(
        tok.astype(jnp.int32) + offset)
    return jnp.transpose(padded, (1, 0)).reshape(ROWS)


def forward(params, x_tok, cond_tok, barpos_tok):
    H = HIDDEN_DIM

    # --- fused embedding/encoder table: [emb@Wx ; cond@Wc ; barpos@Wb ; b_enc ; zeros] ---
    w_x = params["W_enc"][:EMBED_DIM]
    w_c = params["W_enc"][EMBED_DIM:EMBED_DIM + COND_EMBED_DIM]
    w_b = params["W_enc"][EMBED_DIM + COND_EMBED_DIM:]
    table = jnp.zeros((TABLE_K, H), jnp.float32)
    table = table.at[X_OFF:X_OFF + VOCAB_SIZE].set(params["emb"] @ w_x)
    table = table.at[C_OFF:C_OFF + COND_VOCAB_SIZE].set(params["cond_emb"] @ w_c)
    table = table.at[B_OFF:B_OFF + BARPOS_DIM].set(params["barpos_emb"] @ w_b)
    table = table.at[BIAS_LANE].set(params["b_enc"])

    # --- per-row BatchNorm scale/shift pack (encode_bn & decode_bn, eval mode) ---
    esc, esh = _bn_scale_shift(params["enc_bn_gamma"], params["enc_bn_beta"],
                               params["enc_bn_mean"], params["enc_bn_var"])
    dsc, dsh = _bn_scale_shift(params["dec_bn_gamma"], params["dec_bn_beta"],
                               params["dec_bn_mean"], params["dec_bn_var"])
    bn_pack = jnp.stack([_per_row(esc), _per_row(esh),
                         _per_row(dsc), _per_row(dsh)], axis=1)           # (ROWS, 4)

    # --- LSTM weight slab: one operand for both layers ---
    lstm_slab = jnp.zeros((NUM_RNN_LAYERS, LSTM_ROWS, 4 * H), jnp.float32)
    lstm_slab = lstm_slab.at[:, 0:H, :].set(params["lstm_wih"])
    lstm_slab = lstm_slab.at[:, H:2 * H, :].set(params["lstm_whh"])
    lstm_slab = lstm_slab.at[:, 2 * H:2 * H + 1, :].set(params["lstm_b"])

    # --- decoder slab (W_dec2 rows >= MID_DIM stay zero: padding is bit-exact) ---
    dec_slab = jnp.zeros((DEC_ROWS, MID_PAD), jnp.float32)
    dec_slab = dec_slab.at[D_WD1:D_WD1 + H, :MID_DIM].set(params["W_dec1"])
    dec_slab = dec_slab.at[D_BD1, :MID_DIM].set(params["b_dec1"])
    dec_slab = dec_slab.at[D_WD2:D_WD2 + MID_DIM, :OUTPUT_DIM].set(params["W_dec2"])
    dec_slab = dec_slab.at[D_BD2, :OUTPUT_DIM].set(params["b_dec2"])

    # --- token pack: time-major flat rows, table offsets pre-added ---
    tok_pack = jnp.stack([_flat_tokens(x_tok, X_OFF),
                          _flat_tokens(cond_tok, C_OFF),
                          _flat_tokens(barpos_tok, B_OFF)], axis=1)       # (ROWS, 3) int32

    # --- single fused kernel launch; everything lives in VMEM as one block ---
    out_flat = pl.pallas_call(
        _fused_kernel,
        out_shape=jax.ShapeDtypeStruct((ROWS, OUTPUT_DIM), jnp.float32),
        cost_estimate=pl.CostEstimate(flops=4_300_000,
                                      transcendentals=45_000,
                                      bytes_accessed=150_000),
    )(tok_pack, table, bn_pack, lstm_slab, dec_slab)

    out = out_flat.reshape(SEQ_LEN, BATCH_PAD, OUTPUT_DIM)[:, :x_tok.shape[0], :]
    return jnp.transpose(out, (1, 0, 2))                      # (B, T, OUTPUT_DIM)


# ---------------------------------------------------------------------------
# Parameters
# ---------------------------------------------------------------------------
def init_params(key):
    ks = jax.random.split(key, 20)

    def rnd(k, shape, scale=0.1):
        return (scale * jax.random.normal(k, shape)).astype(jnp.float32)

    p = {}
    p["emb"] = rnd(ks[0], (VOCAB_SIZE, EMBED_DIM))
    p["cond_emb"] = rnd(ks[1], (COND_VOCAB_SIZE, COND_EMBED_DIM))
    p["barpos_emb"] = rnd(ks[2], (BARPOS_DIM, BARPOS_EMBED_DIM))
    # encoder Linear (stored as (in, out); equivalent to PyTorch's x @ W^T + b)
    p["W_enc"] = rnd(ks[3], (ENC_IN, HIDDEN_DIM))
    p["b_enc"] = rnd(ks[4], (HIDDEN_DIM,))
    # encode_bn = BatchNorm1d(seq_len), eval mode
    p["enc_bn_gamma"] = (1.0 + 0.1 * jax.random.normal(ks[5], (SEQ_LEN,))).astype(jnp.float32)
    p["enc_bn_beta"] = rnd(ks[6], (SEQ_LEN,))
    p["enc_bn_mean"] = jnp.zeros((SEQ_LEN,), jnp.float32)
    p["enc_bn_var"] = jnp.ones((SEQ_LEN,), jnp.float32)
    # LSTM (PyTorch gate order i, f, g, o); weights stored transposed (in, 4H),
    # bias = b_ih + b_hh combined, stored as (L, 1, 4H)
    p["lstm_wih"] = rnd(ks[7], (NUM_RNN_LAYERS, HIDDEN_DIM, 4 * HIDDEN_DIM))
    p["lstm_whh"] = rnd(ks[8], (NUM_RNN_LAYERS, HIDDEN_DIM, 4 * HIDDEN_DIM))
    p["lstm_b"] = rnd(ks[9], (NUM_RNN_LAYERS, 1, 4 * HIDDEN_DIM))
    # decoder
    p["W_dec1"] = rnd(ks[10], (HIDDEN_DIM, MID_DIM))
    p["b_dec1"] = rnd(ks[11], (MID_DIM,))
    p["dec_bn_gamma"] = (1.0 + 0.1 * jax.random.normal(ks[12], (SEQ_LEN,))).astype(jnp.float32)
    p["dec_bn_beta"] = rnd(ks[13], (SEQ_LEN,))
    p["dec_bn_mean"] = jnp.zeros((SEQ_LEN,), jnp.float32)
    p["dec_bn_var"] = jnp.ones((SEQ_LEN,), jnp.float32)
    p["W_dec2"] = rnd(ks[14], (MID_DIM, OUTPUT_DIM))
    p["b_dec2"] = rnd(ks[15], (OUTPUT_DIM,))
    return p


# ---------------------------------------------------------------------------
# Pure-JAX reference (same eval-mode semantics, unpadded / unfused math)
# ---------------------------------------------------------------------------
def reference(params, x_tok, cond_tok, barpos_tok):
    xe = params["emb"][x_tok]
    ce = params["cond_emb"][cond_tok]
    be = params["barpos_emb"][barpos_tok]
    cat = jnp.concatenate([xe, ce, be], axis=2)
    esc, esh = _bn_scale_shift(params["enc_bn_gamma"], params["enc_bn_beta"],
                               params["enc_bn_mean"], params["enc_bn_var"])
    enc = cat @ params["W_enc"] + params["b_enc"]
    enc = enc * esc[None, :, None] + esh[None, :, None]
    enc = jnp.maximum(enc, 0.0)

    B, T, H = enc.shape
    L = NUM_RNN_LAYERS
    h = jnp.zeros((L, B, H), jnp.float32)
    c = jnp.zeros((L, B, H), jnp.float32)
    outs = []
    for t in range(T):
        inp = enc[:, t, :]
        new_h, new_c = [], []
        for layer in range(L):
            gates = inp @ params["lstm_wih"][layer] + h[layer] @ params["lstm_whh"][layer] \
                    + params["lstm_b"][layer]
            i_g = jax.nn.sigmoid(gates[:, 0 * H:1 * H])
            f_g = jax.nn.sigmoid(gates[:, 1 * H:2 * H])
            g_g = jnp.tanh(gates[:, 2 * H:3 * H])
            o_g = jax.nn.sigmoid(gates[:, 3 * H:4 * H])
            cc = f_g * c[layer] + i_g * g_g
            hh = o_g * jnp.tanh(cc)
            new_h.append(hh)
            new_c.append(cc)
            inp = hh
        h = jnp.stack(new_h)
        c = jnp.stack(new_c)
        outs.append(inp)
    lstm_out = jnp.stack(outs, axis=1)

    dsc, dsh = _bn_scale_shift(params["dec_bn_gamma"], params["dec_bn_beta"],
                               params["dec_bn_mean"], params["dec_bn_var"])
    d1 = lstm_out @ params["W_dec1"] + params["b_dec1"]
    d1 = d1 * dsc[None, :, None] + dsh[None, :, None]
    d1 = jnp.maximum(d1, 0.0)
    d2 = d1 @ params["W_dec2"] + params["b_dec2"]
    return jax.nn.log_softmax(d2, axis=2)


if __name__ == "__main__":
    key = jax.random.PRNGKey(0)
    pkey, k1, k2, k3 = jax.random.split(key, 4)
    params = init_params(pkey)

    x_tok = jax.random.randint(k1, (BATCH, SEQ_LEN), 0, VOCAB_SIZE)
    cond_tok = jax.random.randint(k2, (BATCH, SEQ_LEN), 0, COND_VOCAB_SIZE)
    barpos_tok = jax.random.randint(k3, (BATCH, SEQ_LEN), 0, BARPOS_DIM)

    fwd = jax.jit(forward)
    out = fwd(params, x_tok, cond_tok, barpos_tok)
    out = jax.block_until_ready(out)

    ref = reference(params, x_tok, cond_tok, barpos_tok)
    np.testing.assert_allclose(np.asarray(out), np.asarray(ref), rtol=5e-4, atol=5e-4)
    assert out.shape == (BATCH, SEQ_LEN, OUTPUT_DIM)
    print("KERNEL_OK")
</pallas_src>

<mosaic_0001>
module attributes {stable_mosaic.version = 11 : i64} {
  func.func @_fused_kernel(%arg0: memref<64x3xi32, #tpu.memory_space<vmem>>, %arg1: memref<128x32xf32, #tpu.memory_space<vmem>>, %arg2: memref<64x4xf32, #tpu.memory_space<vmem>>, %arg3: memref<2x72x128xf32, #tpu.memory_space<vmem>>, %arg4: memref<112x64xf32, #tpu.memory_space<vmem>>, %arg5: memref<64x48xf32, #tpu.memory_space<vmem>>) attributes {dimension_semantics = [], scalar_prefetch = 0 : i64, scratch_operands = 0 : i64, tpu.core_type = #tpu.core_type<tc>} {
    %c0 = arith.constant 0 : index
    %c0_0 = arith.constant 0 : index
    %0 = vector.load %arg0[%c0, %c0_0] : memref<64x3xi32, #tpu.memory_space<vmem>>, vector<64x3xi32>
    %1 = tpu.iota {dimensions = array<i32: 1>} : vector<64x128xi32>
    %2 = vector.extract_strided_slice %0 {offsets = [0, 0], sizes = [64, 1], strides = [1, 1]} : vector<64x3xi32> to vector<64x1xi32>
    %3 = vector.broadcast %2 : vector<64x1xi32> to vector<64x128xi32>
    %4 = arith.cmpi eq, %1, %3 : vector<64x128xi32>
    %5 = vector.extract_strided_slice %0 {offsets = [0, 1], sizes = [64, 1], strides = [1, 1]} : vector<64x3xi32> to vector<64x1xi32>
    %6 = vector.broadcast %5 : vector<64x1xi32> to vector<64x128xi32>
    %7 = arith.cmpi eq, %1, %6 : vector<64x128xi32>
    %8 = arith.ori %4, %7 : vector<64x128xi1>
    %9 = vector.extract_strided_slice %0 {offsets = [0, 2], sizes = [64, 1], strides = [1, 1]} : vector<64x3xi32> to vector<64x1xi32>
    %10 = vector.broadcast %9 : vector<64x1xi32> to vector<64x128xi32>
    %11 = arith.cmpi eq, %1, %10 : vector<64x128xi32>
    %12 = arith.ori %8, %11 : vector<64x128xi1>
    %c76_i32 = arith.constant 76 : i32
    %13 = vector.broadcast %c76_i32 : i32 to vector<64x128xi32>
    %14 = arith.cmpi eq, %1, %13 : vector<64x128xi32>
    %15 = arith.ori %12, %14 : vector<64x128xi1>
    %16 = arith.extui %15 : vector<64x128xi1> to vector<64x128xi32>
    %17 = arith.sitofp %16 : vector<64x128xi32> to vector<64x128xf32>
    %c0_1 = arith.constant 0 : index
    %c0_2 = arith.constant 0 : index
    %18 = vector.load %arg1[%c0_1, %c0_2] : memref<128x32xf32, #tpu.memory_space<vmem>>, vector<128x32xf32>
    %cst = arith.constant dense<0.000000e+00> : vector<64x32xf32>
    %19 = tpu.matmul %17, %18, %cst {dimension_numbers = #tpu.dot_dimension_numbers<[1], [0], [0], [1], [0, 0, 1, 1], [], []>} : vector<64x128xf32>, vector<128x32xf32>, vector<64x32xf32> -> vector<64x32xf32>
    %c0_3 = arith.constant 0 : index
    %c0_4 = arith.constant 0 : index
    %20 = vector.load %arg2[%c0_3, %c0_4] : memref<64x4xf32, #tpu.memory_space<vmem>>, vector<64x4xf32>
    %21 = vector.extract_strided_slice %20 {offsets = [0, 0], sizes = [64, 1], strides = [1, 1]} : vector<64x4xf32> to vector<64x1xf32>
    %22 = vector.extract_strided_slice %20 {offsets = [0, 1], sizes = [64, 1], strides = [1, 1]} : vector<64x4xf32> to vector<64x1xf32>
    %23 = vector.extract_strided_slice %20 {offsets = [0, 2], sizes = [64, 1], strides = [1, 1]} : vector<64x4xf32> to vector<64x1xf32>
    %24 = vector.extract_strided_slice %20 {offsets = [0, 3], sizes = [64, 1], strides = [1, 1]} : vector<64x4xf32> to vector<64x1xf32>
    %25 = vector.broadcast %21 : vector<64x1xf32> to vector<64x32xf32>
    %26 = arith.mulf %19, %25 : vector<64x32xf32>
    %27 = vector.broadcast %22 : vector<64x1xf32> to vector<64x32xf32>
    %28 = arith.addf %26, %27 : vector<64x32xf32>
    %cst_5 = arith.constant 0.000000e+00 : f32
    %29 = vector.broadcast %cst_5 : f32 to vector<64x32xf32>
    %30 = arith.maximumf %28, %29 : vector<64x32xf32>
    %c0_6 = arith.constant 0 : index
    %c0_7 = arith.constant 0 : index
    %c0_8 = arith.constant 0 : index
    %31 = vector.load %arg3[%c0_6, %c0_7, %c0_8] : memref<2x72x128xf32, #tpu.memory_space<vmem>>, vector<1x32x128xf32>
    %32 = vector.shape_cast %31 : vector<1x32x128xf32> to vector<32x128xf32>
    %c0_9 = arith.constant 0 : index
    %c32 = arith.constant 32 : index
    %c0_10 = arith.constant 0 : index
    %33 = vector.load %arg3[%c0_9, %c32, %c0_10] : memref<2x72x128xf32, #tpu.memory_space<vmem>>, vector<1x32x128xf32>
    %34 = vector.shape_cast %33 : vector<1x32x128xf32> to vector<32x128xf32>
    %c0_11 = arith.constant 0 : index
    %c64 = arith.constant 64 : index
    %c0_12 = arith.constant 0 : index
    %35 = vector.load %arg3[%c0_11, %c64, %c0_12] : memref<2x72x128xf32, #tpu.memory_space<vmem>>, vector<1x1x128xf32>
    %36 = vector.shape_cast %35 : vector<1x1x128xf32> to vector<1x128xf32>
    %cst_13 = arith.constant dense<0.000000e+00> : vector<64x128xf32>
    %37 = tpu.matmul %30, %32, %cst_13 {dimension_numbers = #tpu.dot_dimension_numbers<[1], [0], [0], [1], [0, 0, 1, 1], [], []>} : vector<64x32xf32>, vector<32x128xf32>, vector<64x128xf32> -> vector<64x128xf32>
    %38 = vector.broadcast %36 : vector<1x128xf32> to vector<64x128xf32>
    %39 = arith.addf %37, %38 : vector<64x128xf32>
    %cst_14 = arith.constant 0.000000e+00 : f32
    %40 = vector.broadcast %cst_14 : f32 to vector<8x32xf32>
    %41 = vector.extract_strided_slice %39 {offsets = [0, 0], sizes = [8, 128], strides = [1, 1]} : vector<64x128xf32> to vector<8x128xf32>
    %42 = arith.negf %41 : vector<8x128xf32>
    %43 = math.exp %42 : vector<8x128xf32>
    %cst_15 = arith.constant 1.000000e+00 : f32
    %44 = vector.broadcast %cst_15 : f32 to vector<8x128xf32>
    %45 = arith.addf %44, %43 : vector<8x128xf32>
    %46 = arith.divf %44, %45 : vector<8x128xf32>
    %47 = math.tanh %41 : vector<8x128xf32>
    %48 = vector.extract_strided_slice %46 {offsets = [0, 0], sizes = [8, 32], strides = [1, 1]} : vector<8x128xf32> to vector<8x32xf32>
    %49 = vector.extract_strided_slice %46 {offsets = [0, 32], sizes = [8, 32], strides = [1, 1]} : vector<8x128xf32> to vector<8x32xf32>
    %50 = vector.extract_strided_slice %47 {offsets = [0, 64], sizes = [8, 32], strides = [1, 1]} : vector<8x128xf32> to vector<8x32xf32>
    %51 = vector.extract_strided_slice %46 {offsets = [0, 96], sizes = [8, 32], strides = [1, 1]} : vector<8x128xf32> to vector<8x32xf32>
    %52 = arith.mulf %49, %40 : vector<8x32xf32>
    %53 = arith.mulf %48, %50 : vector<8x32xf32>
    %54 = arith.addf %52, %53 : vector<8x32xf32>
    %55 = math.tanh %54 : vector<8x32xf32>
    %56 = arith.mulf %51, %55 : vector<8x32xf32>
    %57 = vector.extract_strided_slice %39 {offsets = [8, 0], sizes = [8, 128], strides = [1, 1]} : vector<64x128xf32> to vector<8x128xf32>
    %cst_16 = arith.constant dense<0.000000e+00> : vector<8x128xf32>
    %58 = tpu.matmul %56, %34, %cst_16 {dimension_numbers = #tpu.dot_dimension_numbers<[1], [0], [0], [1], [0, 0, 1, 1], [], []>} : vector<8x32xf32>, vector<32x128xf32>, vector<8x128xf32> -> vector<8x128xf32>
    %59 = arith.addf %57, %58 : vector<8x128xf32>
    %60 = arith.negf %59 : vector<8x128xf32>
    %61 = math.exp %60 : vector<8x128xf32>
    %cst_17 = arith.constant 1.000000e+00 : f32
    %62 = vector.broadcast %cst_17 : f32 to vector<8x128xf32>
    %63 = arith.addf %62, %61 : vector<8x128xf32>
    %64 = arith.divf %62, %63 : vector<8x128xf32>
    %65 = math.tanh %59 : vector<8x128xf32>
    %66 = vector.extract_strided_slice %64 {offsets = [0, 0], sizes = [8, 32], strides = [1, 1]} : vector<8x128xf32> to vector<8x32xf32>
    %67 = vector.extract_strided_slice %64 {offsets = [0, 32], sizes = [8, 32], strides = [1, 1]} : vector<8x128xf32> to vector<8x32xf32>
    %68 = vector.extract_strided_slice %65 {offsets = [0, 64], sizes = [8, 32], strides = [1, 1]} : vector<8x128xf32> to vector<8x32xf32>
    %69 = vector.extract_strided_slice %64 {offsets = [0, 96], sizes = [8, 32], strides = [1, 1]} : vector<8x128xf32> to vector<8x32xf32>
    %70 = arith.mulf %67, %54 : vector<8x32xf32>
    %71 = arith.mulf %66, %68 : vector<8x32xf32>
    %72 = arith.addf %70, %71 : vector<8x32xf32>
    %73 = math.tanh %72 : vector<8x32xf32>
    %74 = arith.mulf %69, %73 : vector<8x32xf32>
    %75 = vector.extract_strided_slice %39 {offsets = [16, 0], sizes = [8, 128], strides = [1, 1]} : vector<64x128xf32> to vector<8x128xf32>
    %cst_18 = arith.constant dense<0.000000e+00> : vector<8x128xf32>
    %76 = tpu.matmul %74, %34, %cst_18 {dimension_numbers = #tpu.dot_dimension_numbers<[1], [0], [0], [1], [0, 0, 1, 1], [], []>} : vector<8x32xf32>, vector<32x128xf32>, vector<8x128xf32> -> vector<8x128xf32>
    %77 = arith.addf %75, %76 : vector<8x128xf32>
    %78 = arith.negf %77 : vector<8x128xf32>
    %79 = math.exp %78 : vector<8x128xf32>
    %cst_19 = arith.constant 1.000000e+00 : f32
    %80 = vector.broadcast %cst_19 : f32 to vector<8x128xf32>
    %81 = arith.addf %80, %79 : vector<8x128xf32>
    %82 = arith.divf %80, %81 : vector<8x128xf32>
    %83 = math.tanh %77 : vector<8x128xf32>
    %84 = vector.extract_strided_slice %82 {offsets = [0, 0], sizes = [8, 32], strides = [1, 1]} : vector<8x128xf32> to vector<8x32xf32>
    %85 = vector.extract_strided_slice %82 {offsets = [0, 32], sizes = [8, 32], strides = [1, 1]} : vector<8x128xf32> to vector<8x32xf32>
    %86 = vector.extract_strided_slice %83 {offsets = [0, 64], sizes = [8, 32], strides = [1, 1]} : vector<8x128xf32> to vector<8x32xf32>
    %87 = vector.extract_strided_slice %82 {offsets = [0, 96], sizes = [8, 32], strides = [1, 1]} : vector<8x128xf32> to vector<8x32xf32>
    %88 = arith.mulf %85, %72 : vector<8x32xf32>
    %89 = arith.mulf %84, %86 : vector<8x32xf32>
    %90 = arith.addf %88, %89 : vector<8x32xf32>
    %91 = math.tanh %90 : vector<8x32xf32>
    %92 = arith.mulf %87, %91 : vector<8x32xf32>
    %93 = vector.extract_strided_slice %39 {offsets = [24, 0], sizes = [8, 128], strides = [1, 1]} : vector<64x128xf32> to vector<8x128xf32>
    %cst_20 = arith.constant dense<0.000000e+00> : vector<8x128xf32>
    %94 = tpu.matmul %92, %34, %cst_20 {dimension_numbers = #tpu.dot_dimension_numbers<[1], [0], [0], [1], [0, 0, 1, 1], [], []>} : vector<8x32xf32>, vector<32x128xf32>, vector<8x128xf32> -> vector<8x128xf32>
    %95 = arith.addf %93, %94 : vector<8x128xf32>
    %96 = arith.negf %95 : vector<8x128xf32>
    %97 = math.exp %96 : vector<8x128xf32>
    %cst_21 = arith.constant 1.000000e+00 : f32
    %98 = vector.broadcast %cst_21 : f32 to vector<8x128xf32>
    %99 = arith.addf %98, %97 : vector<8x128xf32>
    %100 = arith.divf %98, %99 : vector<8x128xf32>
    %101 = math.tanh %95 : vector<8x128xf32>
    %102 = vector.extract_strided_slice %100 {offsets = [0, 0], sizes = [8, 32], strides = [1, 1]} : vector<8x128xf32> to vector<8x32xf32>
    %103 = vector.extract_strided_slice %100 {offsets = [0, 32], sizes = [8, 32], strides = [1, 1]} : vector<8x128xf32> to vector<8x32xf32>
    %104 = vector.extract_strided_slice %101 {offsets = [0, 64], sizes = [8, 32], strides = [1, 1]} : vector<8x128xf32> to vector<8x32xf32>
    %105 = vector.extract_strided_slice %100 {offsets = [0, 96], sizes = [8, 32], strides = [1, 1]} : vector<8x128xf32> to vector<8x32xf32>
    %106 = arith.mulf %103, %90 : vector<8x32xf32>
    %107 = arith.mulf %102, %104 : vector<8x32xf32>
    %108 = arith.addf %106, %107 : vector<8x32xf32>
    %109 = math.tanh %108 : vector<8x32xf32>
    %110 = arith.mulf %105, %109 : vector<8x32xf32>
    %111 = vector.extract_strided_slice %39 {offsets = [32, 0], sizes = [8, 128], strides = [1, 1]} : vector<64x128xf32> to vector<8x128xf32>
    %cst_22 = arith.constant dense<0.000000e+00> : vector<8x128xf32>
    %112 = tpu.matmul %110, %34, %cst_22 {dimension_numbers = #tpu.dot_dimension_numbers<[1], [0], [0], [1], [0, 0, 1, 1], [], []>} : vector<8x32xf32>, vector<32x128xf32>, vector<8x128xf32> -> vector<8x128xf32>
    %113 = arith.addf %111, %112 : vector<8x128xf32>
    %114 = arith.negf %113 : vector<8x128xf32>
    %115 = math.exp %114 : vector<8x128xf32>
    %cst_23 = arith.constant 1.000000e+00 : f32
    %116 = vector.broadcast %cst_23 : f32 to vector<8x128xf32>
    %117 = arith.addf %116, %115 : vector<8x128xf32>
    %118 = arith.divf %116, %117 : vector<8x128xf32>
    %119 = math.tanh %113 : vector<8x128xf32>
    %120 = vector.extract_strided_slice %118 {offsets = [0, 0], sizes = [8, 32], strides = [1, 1]} : vector<8x128xf32> to vector<8x32xf32>
    %121 = vector.extract_strided_slice %118 {offsets = [0, 32], sizes = [8, 32], strides = [1, 1]} : vector<8x128xf32> to vector<8x32xf32>
    %122 = vector.extract_strided_slice %119 {offsets = [0, 64], sizes = [8, 32], strides = [1, 1]} : vector<8x128xf32> to vector<8x32xf32>
    %123 = vector.extract_strided_slice %118 {offsets = [0, 96], sizes = [8, 32], strides = [1, 1]} : vector<8x128xf32> to vector<8x32xf32>
    %124 = arith.mulf %121, %108 : vector<8x32xf32>
    %125 = arith.mulf %120, %122 : vector<8x32xf32>
    %126 = arith.addf %124, %125 : vector<8x32xf32>
    %127 = math.tanh %126 : vector<8x32xf32>
    %128 = arith.mulf %123, %127 : vector<8x32xf32>
    %129 = vector.extract_strided_slice %39 {offsets = [40, 0], sizes = [8, 128], strides = [1, 1]} : vector<64x128xf32> to vector<8x128xf32>
    %cst_24 = arith.constant dense<0.000000e+00> : vector<8x128xf32>
    %130 = tpu.matmul %128, %34, %cst_24 {dimension_numbers = #tpu.dot_dimension_numbers<[1], [0], [0], [1], [0, 0, 1, 1], [], []>} : vector<8x32xf32>, vector<32x128xf32>, vector<8x128xf32> -> vector<8x128xf32>
    %131 = arith.addf %129, %130 : vector<8x128xf32>
    %132 = arith.negf %131 : vector<8x128xf32>
    %133 = math.exp %132 : vector<8x128xf32>
    %cst_25 = arith.constant 1.000000e+00 : f32
    %134 = vector.broadcast %cst_25 : f32 to vector<8x128xf32>
    %135 = arith.addf %134, %133 : vector<8x128xf32>
    %136 = arith.divf %134, %135 : vector<8x128xf32>
    %137 = math.tanh %131 : vector<8x128xf32>
    %138 = vector.extract_strided_slice %136 {offsets = [0, 0], sizes = [8, 32], strides = [1, 1]} : vector<8x128xf32> to vector<8x32xf32>
    %139 = vector.extract_strided_slice %136 {offsets = [0, 32], sizes = [8, 32], strides = [1, 1]} : vector<8x128xf32> to vector<8x32xf32>
    %140 = vector.extract_strided_slice %137 {offsets = [0, 64], sizes = [8, 32], strides = [1, 1]} : vector<8x128xf32> to vector<8x32xf32>
    %141 = vector.extract_strided_slice %136 {offsets = [0, 96], sizes = [8, 32], strides = [1, 1]} : vector<8x128xf32> to vector<8x32xf32>
    %142 = arith.mulf %139, %126 : vector<8x32xf32>
    %143 = arith.mulf %138, %140 : vector<8x32xf32>
    %144 = arith.addf %142, %143 : vector<8x32xf32>
    %145 = math.tanh %144 : vector<8x32xf32>
    %146 = arith.mulf %141, %145 : vector<8x32xf32>
    %147 = vector.extract_strided_slice %39 {offsets = [48, 0], sizes = [8, 128], strides = [1, 1]} : vector<64x128xf32> to vector<8x128xf32>
    %cst_26 = arith.constant dense<0.000000e+00> : vector<8x128xf32>
    %148 = tpu.matmul %146, %34, %cst_26 {dimension_numbers = #tpu.dot_dimension_numbers<[1], [0], [0], [1], [0, 0, 1, 1], [], []>} : vector<8x32xf32>, vector<32x128xf32>, vector<8x128xf32> -> vector<8x128xf32>
    %149 = arith.addf %147, %148 : vector<8x128xf32>
    %150 = arith.negf %149 : vector<8x128xf32>
    %151 = math.exp %150 : vector<8x128xf32>
    %cst_27 = arith.constant 1.000000e+00 : f32
    %152 = vector.broadcast %cst_27 : f32 to vector<8x128xf32>
    %153 = arith.addf %152, %151 : vector<8x128xf32>
    %154 = arith.divf %152, %153 : vector<8x128xf32>
    %155 = math.tanh %149 : vector<8x128xf32>
    %156 = vector.extract_strided_slice %154 {offsets = [0, 0], sizes = [8, 32], strides = [1, 1]} : vector<8x128xf32> to vector<8x32xf32>
    %157 = vector.extract_strided_slice %154 {offsets = [0, 32], sizes = [8, 32], strides = [1, 1]} : vector<8x128xf32> to vector<8x32xf32>
    %158 = vector.extract_strided_slice %155 {offsets = [0, 64], sizes = [8, 32], strides = [1, 1]} : vector<8x128xf32> to vector<8x32xf32>
    %159 = vector.extract_strided_slice %154 {offsets = [0, 96], sizes = [8, 32], strides = [1, 1]} : vector<8x128xf32> to vector<8x32xf32>
    %160 = arith.mulf %157, %144 : vector<8x32xf32>
    %161 = arith.mulf %156, %158 : vector<8x32xf32>
    %162 = arith.addf %160, %161 : vector<8x32xf32>
    %163 = math.tanh %162 : vector<8x32xf32>
    %164 = arith.mulf %159, %163 : vector<8x32xf32>
    %165 = vector.extract_strided_slice %39 {offsets = [56, 0], sizes = [8, 128], strides = [1, 1]} : vector<64x128xf32> to vector<8x128xf32>
    %cst_28 = arith.constant dense<0.000000e+00> : vector<8x128xf32>
    %166 = tpu.matmul %164, %34, %cst_28 {dimension_numbers = #tpu.dot_dimension_numbers<[1], [0], [0], [1], [0, 0, 1, 1], [], []>} : vector<8x32xf32>, vector<32x128xf32>, vector<8x128xf32> -> vector<8x128xf32>
    %167 = arith.addf %165, %166 : vector<8x128xf32>
    %168 = arith.negf %167 : vector<8x128xf32>
    %169 = math.exp %168 : vector<8x128xf32>
    %cst_29 = arith.constant 1.000000e+00 : f32
    %170 = vector.broadcast %cst_29 : f32 to vector<8x128xf32>
    %171 = arith.addf %170, %169 : vector<8x128xf32>
    %172 = arith.divf %170, %171 : vector<8x128xf32>
    %173 = math.tanh %167 : vector<8x128xf32>
    %174 = vector.extract_strided_slice %172 {offsets = [0, 0], sizes = [8, 32], strides = [1, 1]} : vector<8x128xf32> to vector<8x32xf32>
    %175 = vector.extract_strided_slice %172 {offsets = [0, 32], sizes = [8, 32], strides = [1, 1]} : vector<8x128xf32> to vector<8x32xf32>
    %176 = vector.extract_strided_slice %173 {offsets = [0, 64], sizes = [8, 32], strides = [1, 1]} : vector<8x128xf32> to vector<8x32xf32>
    %177 = vector.extract_strided_slice %172 {offsets = [0, 96], sizes = [8, 32], strides = [1, 1]} : vector<8x128xf32> to vector<8x32xf32>
    %178 = arith.mulf %175, %162 : vector<8x32xf32>
    %179 = arith.mulf %174, %176 : vector<8x32xf32>
    %180 = arith.addf %178, %179 : vector<8x32xf32>
    %181 = math.tanh %180 : vector<8x32xf32>
    %182 = arith.mulf %177, %181 : vector<8x32xf32>
    %183 = tpu.concatenate %56, %74, %92, %110, %128, %146, %164, %182 in 0 : vector<8x32xf32>, vector<8x32xf32>, vector<8x32xf32>, vector<8x32xf32>, vector<8x32xf32>, vector<8x32xf32>, vector<8x32xf32>, vector<8x32xf32> -> vector<64x32xf32>
    %c1 = arith.constant 1 : index
    %c0_30 = arith.constant 0 : index
    %c0_31 = arith.constant 0 : index
    %184 = vector.load %arg3[%c1, %c0_30, %c0_31] : memref<2x72x128xf32, #tpu.memory_space<vmem>>, vector<1x32x128xf32>
    %185 = vector.shape_cast %184 : vector<1x32x128xf32> to vector<32x128xf32>
    %c1_32 = arith.constant 1 : index
    %c32_33 = arith.constant 32 : index
    %c0_34 = arith.constant 0 : index
    %186 = vector.load %arg3[%c1_32, %c32_33, %c0_34] : memref<2x72x128xf32, #tpu.memory_space<vmem>>, vector<1x32x128xf32>
    %187 = vector.shape_cast %186 : vector<1x32x128xf32> to vector<32x128xf32>
    %c1_35 = arith.constant 1 : index
    %c64_36 = arith.constant 64 : index
    %c0_37 = arith.constant 0 : index
    %188 = vector.load %arg3[%c1_35, %c64_36, %c0_37] : memref<2x72x128xf32, #tpu.memory_space<vmem>>, vector<1x1x128xf32>
    %189 = vector.shape_cast %188 : vector<1x1x128xf32> to vector<1x128xf32>
    %cst_38 = arith.constant dense<0.000000e+00> : vector<64x128xf32>
    %190 = tpu.matmul %183, %185, %cst_38 {dimension_numbers = #tpu.dot_dimension_numbers<[1], [0], [0], [1], [0, 0, 1, 1], [], []>} : vector<64x32xf32>, vector<32x128xf32>, vector<64x128xf32> -> vector<64x128xf32>
    %191 = vector.broadcast %189 : vector<1x128xf32> to vector<64x128xf32>
    %192 = arith.addf %190, %191 : vector<64x128xf32>
    %cst_39 = arith.constant 0.000000e+00 : f32
    %193 = vector.broadcast %cst_39 : f32 to vector<8x32xf32>
    %194 = vector.extract_strided_slice %192 {offsets = [0, 0], sizes = [8, 128], strides = [1, 1]} : vector<64x128xf32> to vector<8x128xf32>
    %195 = arith.negf %194 : vector<8x128xf32>
    %196 = math.exp %195 : vector<8x128xf32>
    %cst_40 = arith.constant 1.000000e+00 : f32
    %197 = vector.broadcast %cst_40 : f32 to vector<8x128xf32>
    %198 = arith.addf %197, %196 : vector<8x128xf32>
    %199 = arith.divf %197, %198 : vector<8x128xf32>
    %200 = math.tanh %194 : vector<8x128xf32>
    %201 = vector.extract_strided_slice %199 {offsets = [0, 0], sizes = [8, 32], strides = [1, 1]} : vector<8x128xf32> to vector<8x32xf32>
    %202 = vector.extract_strided_slice %199 {offsets = [0, 32], sizes = [8, 32], strides = [1, 1]} : vector<8x128xf32> to vector<8x32xf32>
    %203 = vector.extract_strided_slice %200 {offsets = [0, 64], sizes = [8, 32], strides = [1, 1]} : vector<8x128xf32> to vector<8x32xf32>
    %204 = vector.extract_strided_slice %199 {offsets = [0, 96], sizes = [8, 32], strides = [1, 1]} : vector<8x128xf32> to vector<8x32xf32>
    %205 = arith.mulf %202, %193 : vector<8x32xf32>
    %206 = arith.mulf %201, %203 : vector<8x32xf32>
    %207 = arith.addf %205, %206 : vector<8x32xf32>
    %208 = math.tanh %207 : vector<8x32xf32>
    %209 = arith.mulf %204, %208 : vector<8x32xf32>
    %210 = vector.extract_strided_slice %192 {offsets = [8, 0], sizes = [8, 128], strides = [1, 1]} : vector<64x128xf32> to vector<8x128xf32>
    %cst_41 = arith.constant dense<0.000000e+00> : vector<8x128xf32>
    %211 = tpu.matmul %209, %187, %cst_41 {dimension_numbers = #tpu.dot_dimension_numbers<[1], [0], [0], [1], [0, 0, 1, 1], [], []>} : vector<8x32xf32>, vector<32x128xf32>, vector<8x128xf32> -> vector<8x128xf32>
    %212 = arith.addf %210, %211 : vector<8x128xf32>
    %213 = arith.negf %212 : vector<8x128xf32>
    %214 = math.exp %213 : vector<8x128xf32>
    %cst_42 = arith.constant 1.000000e+00 : f32
    %215 = vector.broadcast %cst_42 : f32 to vector<8x128xf32>
    %216 = arith.addf %215, %214 : vector<8x128xf32>
    %217 = arith.divf %215, %216 : vector<8x128xf32>
    %218 = math.tanh %212 : vector<8x128xf32>
    %219 = vector.extract_strided_slice %217 {offsets = [0, 0], sizes = [8, 32], strides = [1, 1]} : vector<8x128xf32> to vector<8x32xf32>
    %220 = vector.extract_strided_slice %217 {offsets = [0, 32], sizes = [8, 32], strides = [1, 1]} : vector<8x128xf32> to vector<8x32xf32>
    %221 = vector.extract_strided_slice %218 {offsets = [0, 64], sizes = [8, 32], strides = [1, 1]} : vector<8x128xf32> to vector<8x32xf32>
    %222 = vector.extract_strided_slice %217 {offsets = [0, 96], sizes = [8, 32], strides = [1, 1]} : vector<8x128xf32> to vector<8x32xf32>
    %223 = arith.mulf %220, %207 : vector<8x32xf32>
    %224 = arith.mulf %219, %221 : vector<8x32xf32>
    %225 = arith.addf %223, %224 : vector<8x32xf32>
    %226 = math.tanh %225 : vector<8x32xf32>
    %227 = arith.mulf %222, %226 : vector<8x32xf32>
    %228 = vector.extract_strided_slice %192 {offsets = [16, 0], sizes = [8, 128], strides = [1, 1]} : vector<64x128xf32> to vector<8x128xf32>
    %cst_43 = arith.constant dense<0.000000e+00> : vector<8x128xf32>
    %229 = tpu.matmul %227, %187, %cst_43 {dimension_numbers = #tpu.dot_dimension_numbers<[1], [0], [0], [1], [0, 0, 1, 1], [], []>} : vector<8x32xf32>, vector<32x128xf32>, vector<8x128xf32> -> vector<8x128xf32>
    %230 = arith.addf %228, %229 : vector<8x128xf32>
    %231 = arith.negf %230 : vector<8x128xf32>
    %232 = math.exp %231 : vector<8x128xf32>
    %cst_44 = arith.constant 1.000000e+00 : f32
    %233 = vector.broadcast %cst_44 : f32 to vector<8x128xf32>
    %234 = arith.addf %233, %232 : vector<8x128xf32>
    %235 = arith.divf %233, %234 : vector<8x128xf32>
    %236 = math.tanh %230 : vector<8x128xf32>
    %237 = vector.extract_strided_slice %235 {offsets = [0, 0], sizes = [8, 32], strides = [1, 1]} : vector<8x128xf32> to vector<8x32xf32>
    %238 = vector.extract_strided_slice %235 {offsets = [0, 32], sizes = [8, 32], strides = [1, 1]} : vector<8x128xf32> to vector<8x32xf32>
    %239 = vector.extract_strided_slice %236 {offsets = [0, 64], sizes = [8, 32], strides = [1, 1]} : vector<8x128xf32> to vector<8x32xf32>
    %240 = vector.extract_strided_slice %235 {offsets = [0, 96], sizes = [8, 32], strides = [1, 1]} : vector<8x128xf32> to vector<8x32xf32>
    %241 = arith.mulf %238, %225 : vector<8x32xf32>
    %242 = arith.mulf %237, %239 : vector<8x32xf32>
    %243 = arith.addf %241, %242 : vector<8x32xf32>
    %244 = math.tanh %243 : vector<8x32xf32>
    %245 = arith.mulf %240, %244 : vector<8x32xf32>
    %246 = vector.extract_strided_slice %192 {offsets = [24, 0], sizes = [8, 128], strides = [1, 1]} : vector<64x128xf32> to vector<8x128xf32>
    %cst_45 = arith.constant dense<0.000000e+00> : vector<8x128xf32>
    %247 = tpu.matmul %245, %187, %cst_45 {dimension_numbers = #tpu.dot_dimension_numbers<[1], [0], [0], [1], [0, 0, 1, 1], [], []>} : vector<8x32xf32>, vector<32x128xf32>, vector<8x128xf32> -> vector<8x128xf32>
    %248 = arith.addf %246, %247 : vector<8x128xf32>
    %249 = arith.negf %248 : vector<8x128xf32>
    %250 = math.exp %249 : vector<8x128xf32>
    %cst_46 = arith.constant 1.000000e+00 : f32
    %251 = vector.broadcast %cst_46 : f32 to vector<8x128xf32>
    %252 = arith.addf %251, %250 : vector<8x128xf32>
    %253 = arith.divf %251, %252 : vector<8x128xf32>
    %254 = math.tanh %248 : vector<8x128xf32>
    %255 = vector.extract_strided_slice %253 {offsets = [0, 0], sizes = [8, 32], strides = [1, 1]} : vector<8x128xf32> to vector<8x32xf32>
    %256 = vector.extract_strided_slice %253 {offsets = [0, 32], sizes = [8, 32], strides = [1, 1]} : vector<8x128xf32> to vector<8x32xf32>
    %257 = vector.extract_strided_slice %254 {offsets = [0, 64], sizes = [8, 32], strides = [1, 1]} : vector<8x128xf32> to vector<8x32xf32>
    %258 = vector.extract_strided_slice %253 {offsets = [0, 96], sizes = [8, 32], strides = [1, 1]} : vector<8x128xf32> to vector<8x32xf32>
    %259 = arith.mulf %256, %243 : vector<8x32xf32>
    %260 = arith.mulf %255, %257 : vector<8x32xf32>
    %261 = arith.addf %259, %260 : vector<8x32xf32>
    %262 = math.tanh %261 : vector<8x32xf32>
    %263 = arith.mulf %258, %262 : vector<8x32xf32>
    %264 = vector.extract_strided_slice %192 {offsets = [32, 0], sizes = [8, 128], strides = [1, 1]} : vector<64x128xf32> to vector<8x128xf32>
    %cst_47 = arith.constant dense<0.000000e+00> : vector<8x128xf32>
    %265 = tpu.matmul %263, %187, %cst_47 {dimension_numbers = #tpu.dot_dimension_numbers<[1], [0], [0], [1], [0, 0, 1, 1], [], []>} : vector<8x32xf32>, vector<32x128xf32>, vector<8x128xf32> -> vector<8x128xf32>
    %266 = arith.addf %264, %265 : vector<8x128xf32>
    %267 = arith.negf %266 : vector<8x128xf32>
    %268 = math.exp %267 : vector<8x128xf32>
    %cst_48 = arith.constant 1.000000e+00 : f32
    %269 = vector.broadcast %cst_48 : f32 to vector<8x128xf32>
    %270 = arith.addf %269, %268 : vector<8x128xf32>
    %271 = arith.divf %269, %270 : vector<8x128xf32>
    %272 = math.tanh %266 : vector<8x128xf32>
    %273 = vector.extract_strided_slice %271 {offsets = [0, 0], sizes = [8, 32], strides = [1, 1]} : vector<8x128xf32> to vector<8x32xf32>
    %274 = vector.extract_strided_slice %271 {offsets = [0, 32], sizes = [8, 32], strides = [1, 1]} : vector<8x128xf32> to vector<8x32xf32>
    %275 = vector.extract_strided_slice %272 {offsets = [0, 64], sizes = [8, 32], strides = [1, 1]} : vector<8x128xf32> to vector<8x32xf32>
    %276 = vector.extract_strided_slice %271 {offsets = [0, 96], sizes = [8, 32], strides = [1, 1]} : vector<8x128xf32> to vector<8x32xf32>
    %277 = arith.mulf %274, %261 : vector<8x32xf32>
    %278 = arith.mulf %273, %275 : vector<8x32xf32>
    %279 = arith.addf %277, %278 : vector<8x32xf32>
    %280 = math.tanh %279 : vector<8x32xf32>
    %281 = arith.mulf %276, %280 : vector<8x32xf32>
    %282 = vector.extract_strided_slice %192 {offsets = [40, 0], sizes = [8, 128], strides = [1, 1]} : vector<64x128xf32> to vector<8x128xf32>
    %cst_49 = arith.constant dense<0.000000e+00> : vector<8x128xf32>
    %283 = tpu.matmul %281, %187, %cst_49 {dimension_numbers = #tpu.dot_dimension_numbers<[1], [0], [0], [1], [0, 0, 1, 1], [], []>} : vector<8x32xf32>, vector<32x128xf32>, vector<8x128xf32> -> vector<8x128xf32>
    %284 = arith.addf %282, %283 : vector<8x128xf32>
    %285 = arith.negf %284 : vector<8x128xf32>
    %286 = math.exp %285 : vector<8x128xf32>
    %cst_50 = arith.constant 1.000000e+00 : f32
    %287 = vector.broadcast %cst_50 : f32 to vector<8x128xf32>
    %288 = arith.addf %287, %286 : vector<8x128xf32>
    %289 = arith.divf %287, %288 : vector<8x128xf32>
    %290 = math.tanh %284 : vector<8x128xf32>
    %291 = vector.extract_strided_slice %289 {offsets = [0, 0], sizes = [8, 32], strides = [1, 1]} : vector<8x128xf32> to vector<8x32xf32>
    %292 = vector.extract_strided_slice %289 {offsets = [0, 32], sizes = [8, 32], strides = [1, 1]} : vector<8x128xf32> to vector<8x32xf32>
    %293 = vector.extract_strided_slice %290 {offsets = [0, 64], sizes = [8, 32], strides = [1, 1]} : vector<8x128xf32> to vector<8x32xf32>
    %294 = vector.extract_strided_slice %289 {offsets = [0, 96], sizes = [8, 32], strides = [1, 1]} : vector<8x128xf32> to vector<8x32xf32>
    %295 = arith.mulf %292, %279 : vector<8x32xf32>
    %296 = arith.mulf %291, %293 : vector<8x32xf32>
    %297 = arith.addf %295, %296 : vector<8x32xf32>
    %298 = math.tanh %297 : vector<8x32xf32>
    %299 = arith.mulf %294, %298 : vector<8x32xf32>
    %300 = vector.extract_strided_slice %192 {offsets = [48, 0], sizes = [8, 128], strides = [1, 1]} : vector<64x128xf32> to vector<8x128xf32>
    %cst_51 = arith.constant dense<0.000000e+00> : vector<8x128xf32>
    %301 = tpu.matmul %299, %187, %cst_51 {dimension_numbers = #tpu.dot_dimension_numbers<[1], [0], [0], [1], [0, 0, 1, 1], [], []>} : vector<8x32xf32>, vector<32x128xf32>, vector<8x128xf32> -> vector<8x128xf32>
    %302 = arith.addf %300, %301 : vector<8x128xf32>
    %303 = arith.negf %302 : vector<8x128xf32>
    %304 = math.exp %303 : vector<8x128xf32>
    %cst_52 = arith.constant 1.000000e+00 : f32
    %305 = vector.broadcast %cst_52 : f32 to vector<8x128xf32>
    %306 = arith.addf %305, %304 : vector<8x128xf32>
    %307 = arith.divf %305, %306 : vector<8x128xf32>
    %308 = math.tanh %302 : vector<8x128xf32>
    %309 = vector.extract_strided_slice %307 {offsets = [0, 0], sizes = [8, 32], strides = [1, 1]} : vector<8x128xf32> to vector<8x32xf32>
    %310 = vector.extract_strided_slice %307 {offsets = [0, 32], sizes = [8, 32], strides = [1, 1]} : vector<8x128xf32> to vector<8x32xf32>
    %311 = vector.extract_strided_slice %308 {offsets = [0, 64], sizes = [8, 32], strides = [1, 1]} : vector<8x128xf32> to vector<8x32xf32>
    %312 = vector.extract_strided_slice %307 {offsets = [0, 96], sizes = [8, 32], strides = [1, 1]} : vector<8x128xf32> to vector<8x32xf32>
    %313 = arith.mulf %310, %297 : vector<8x32xf32>
    %314 = arith.mulf %309, %311 : vector<8x32xf32>
    %315 = arith.addf %313, %314 : vector<8x32xf32>
    %316 = math.tanh %315 : vector<8x32xf32>
    %317 = arith.mulf %312, %316 : vector<8x32xf32>
    %318 = vector.extract_strided_slice %192 {offsets = [56, 0], sizes = [8, 128], strides = [1, 1]} : vector<64x128xf32> to vector<8x128xf32>
    %cst_53 = arith.constant dense<0.000000e+00> : vector<8x128xf32>
    %319 = tpu.matmul %317, %187, %cst_53 {dimension_numbers = #tpu.dot_dimension_numbers<[1], [0], [0], [1], [0, 0, 1, 1], [], []>} : vector<8x32xf32>, vector<32x128xf32>, vector<8x128xf32> -> vector<8x128xf32>
    %320 = arith.addf %318, %319 : vector<8x128xf32>
    %321 = arith.negf %320 : vector<8x128xf32>
    %322 = math.exp %321 : vector<8x128xf32>
    %cst_54 = arith.constant 1.000000e+00 : f32
    %323 = vector.broadcast %cst_54 : f32 to vector<8x128xf32>
    %324 = arith.addf %323, %322 : vector<8x128xf32>
    %325 = arith.divf %323, %324 : vector<8x128xf32>
    %326 = math.tanh %320 : vector<8x128xf32>
    %327 = vector.extract_strided_slice %325 {offsets = [0, 0], sizes = [8, 32], strides = [1, 1]} : vector<8x128xf32> to vector<8x32xf32>
    %328 = vector.extract_strided_slice %325 {offsets = [0, 32], sizes = [8, 32], strides = [1, 1]} : vector<8x128xf32> to vector<8x32xf32>
    %329 = vector.extract_strided_slice %326 {offsets = [0, 64], sizes = [8, 32], strides = [1, 1]} : vector<8x128xf32> to vector<8x32xf32>
    %330 = vector.extract_strided_slice %325 {offsets = [0, 96], sizes = [8, 32], strides = [1, 1]} : vector<8x128xf32> to vector<8x32xf32>
    %331 = arith.mulf %328, %315 : vector<8x32xf32>
    %332 = arith.mulf %327, %329 : vector<8x32xf32>
    %333 = arith.addf %331, %332 : vector<8x32xf32>
    %334 = math.tanh %333 : vector<8x32xf32>
    %335 = arith.mulf %330, %334 : vector<8x32xf32>
    %336 = tpu.concatenate %209, %227, %245, %263, %281, %299, %317, %335 in 0 : vector<8x32xf32>, vector<8x32xf32>, vector<8x32xf32>, vector<8x32xf32>, vector<8x32xf32>, vector<8x32xf32>, vector<8x32xf32>, vector<8x32xf32> -> vector<64x32xf32>
    %c0_55 = arith.constant 0 : index
    %c0_56 = arith.constant 0 : index
    %337 = vector.load %arg4[%c0_55, %c0_56] : memref<112x64xf32, #tpu.memory_space<vmem>>, vector<32x64xf32>
    %c32_57 = arith.constant 32 : index
    %c0_58 = arith.constant 0 : index
    %338 = vector.load %arg4[%c32_57, %c0_58] : memref<112x64xf32, #tpu.memory_space<vmem>>, vector<1x64xf32>
    %c40 = arith.constant 40 : index
    %c0_59 = arith.constant 0 : index
    %339 = vector.load %arg4[%c40, %c0_59] : memref<112x64xf32, #tpu.memory_space<vmem>>, vector<64x48xf32>
    %c104 = arith.constant 104 : index
    %c0_60 = arith.constant 0 : index
    %340 = vector.load %arg4[%c104, %c0_60] : memref<112x64xf32, #tpu.memory_space<vmem>>, vector<1x48xf32>
    %cst_61 = arith.constant dense<0.000000e+00> : vector<64x64xf32>
    %341 = tpu.matmul %336, %337, %cst_61 {dimension_numbers = #tpu.dot_dimension_numbers<[1], [0], [0], [1], [0, 0, 1, 1], [], []>} : vector<64x32xf32>, vector<32x64xf32>, vector<64x64xf32> -> vector<64x64xf32>
    %342 = vector.broadcast %338 : vector<1x64xf32> to vector<64x64xf32>
    %343 = arith.addf %341, %342 : vector<64x64xf32>
    %344 = vector.broadcast %23 : vector<64x1xf32> to vector<64x64xf32>
    %345 = arith.mulf %343, %344 : vector<64x64xf32>
    %346 = vector.broadcast %24 : vector<64x1xf32> to vector<64x64xf32>
    %347 = arith.addf %345, %346 : vector<64x64xf32>
    %cst_62 = arith.constant 0.000000e+00 : f32
    %348 = vector.broadcast %cst_62 : f32 to vector<64x64xf32>
    %349 = arith.maximumf %347, %348 : vector<64x64xf32>
    %cst_63 = arith.constant dense<0.000000e+00> : vector<64x48xf32>
    %350 = tpu.matmul %349, %339, %cst_63 {dimension_numbers = #tpu.dot_dimension_numbers<[1], [0], [0], [1], [0, 0, 1, 1], [], []>} : vector<64x64xf32>, vector<64x48xf32>, vector<64x48xf32> -> vector<64x48xf32>
    %351 = vector.broadcast %340 : vector<1x48xf32> to vector<64x48xf32>
    %352 = arith.addf %350, %351 : vector<64x48xf32>
    %cst_64 = arith.constant dense<0xFF800000> : vector<64xf32>
    %353 = vector.multi_reduction <maximumf>, %352, %cst_64 [1] : vector<64x48xf32> to vector<64xf32>
    %354 = vector.shape_cast %353 : vector<64xf32> to vector<64x1xf32>
    %355 = vector.broadcast %354 : vector<64x1xf32> to vector<64x48xf32>
    %356 = arith.subf %352, %355 : vector<64x48xf32>
    %357 = math.exp %356 : vector<64x48xf32>
    %cst_65 = arith.constant dense<0.000000e+00> : vector<64xf32>
    %358 = vector.multi_reduction <add>, %357, %cst_65 [1] : vector<64x48xf32> to vector<64xf32>
    %359 = vector.shape_cast %358 : vector<64xf32> to vector<64x1xf32>
    %360 = math.log %359 : vector<64x1xf32>
    %361 = arith.addf %354, %360 : vector<64x1xf32>
    %362 = vector.broadcast %361 : vector<64x1xf32> to vector<64x48xf32>
    %363 = arith.subf %352, %362 : vector<64x48xf32>
    %c0_66 = arith.constant 0 : index
    %c0_67 = arith.constant 0 : index
    %364 = vector.load %arg5[%c0_66, %c0_67] : memref<64x48xf32, #tpu.memory_space<vmem>>, vector<64x48xf32>
    tpu.vector_store %arg5[%c0_66, %c0_67], %363 {strides = array<i32>} : memref<64x48xf32, #tpu.memory_space<vmem>>, vector<64x48xf32>,
    return
  }
}

</mosaic_0001>

<llo_original>
// kernel: forward.1
$region0: #{forward.1}
  #allocation0 [shape = 'u32[]', space=smem, size = 0x4, offset = 0x4, fixed_abs, tag = 'smem constant byte address 0x4 - core index']
  #allocation1 [shape = 'u32[72,128]{1,0:T(1,128)}', space=vmem, size = 0x9000, scoped, tag = 'internal scratch']
  %s0 = inlined_call_operand.vmem [shape: s32[64,3], index: 0, kind: input, shape index: {}]
  %s1 = inlined_call_operand.vmem [shape: f32[128,32], index: 1, kind: input, shape index: {}]
  %s2 = inlined_call_operand.vmem [shape: f32[64,4], index: 2, kind: input, shape index: {}]
  %s3 = inlined_call_operand.vmem [shape: f32[2,72,128], index: 3, kind: input, shape index: {}]
  %s4 = inlined_call_operand.vmem [shape: f32[112,64], index: 4, kind: input, shape index: {}]
  %s5 = inlined_call_operand.vmem [shape: f32[64,48], index: 5, kind: output, shape index: {}]
  %s6 = sld [smem:[#allocation0]]
  $region30: #{forward.1} parent=0
    _
  %s8 = ssub.s32 1, %s6
  %s9 = scalar_select 0, %s8, %s6
  // Predicated region
  $region2: #{forward.1} parent=0 // pred_check
    _
  $region3: #{forward.1} parent=0 // pred_check_branch
    %11 = sbr.rel (0) target = $region5
  $region4: #{forward.1} parent=0 // pred_region
    _
  $region5: #{forward.1} parent=0 // pred_fallthru
    _
  // Predicated region
  $region6: #{forward.1} parent=0 // pred_check
    _
  $region7: #{forward.1} parent=0 // pred_check_branch
    %13 = sbr.rel (0) target = $region9
  $region8: #{forward.1} parent=0 // pred_region
    _
  $region9: #{forward.1} parent=0 // pred_fallthru
    _
  // Predicated region
  $region10: #{forward.1} parent=0 // pred_check
    _
  $region11: #{forward.1} parent=0 // pred_check_branch
    %15 = sbr.rel (0) target = $region13
  $region12: #{forward.1} parent=0 // pred_region
    _
  $region13: #{forward.1} parent=0 // pred_fallthru
    _
  // Predicated region
  $region14: #{forward.1} parent=0 // pred_check
    _
  $region15: #{forward.1} parent=0 // pred_check_branch
    %17 = sbr.rel (0) target = $region17
  $region16: #{forward.1} parent=0 // pred_region
    _
  $region17: #{forward.1} parent=0 // pred_fallthru
    _
  // Predicated region
  $region18: #{forward.1} parent=0 // pred_check
    _
  $region19: #{forward.1} parent=0 // pred_check_branch
    %19 = sbr.rel (0) target = $region21
  $region20: #{forward.1} parent=0 // pred_region
    _
  $region21: #{forward.1} parent=0 // pred_fallthru
    _
  %v20 = vld [vmem:[%s0] sm:$0xff]
  %v21 = vld [vmem:[%s0 + $0x8] sm:$0xff]
  %v22 = vld [vmem:[%s0 + $0x10] sm:$0xff]
  %v23 = vld [vmem:[%s0 + $0x18] sm:$0xff]
  %v24 = vld [vmem:[%s0 + $0x20] sm:$0xff]
  %v25 = vld [vmem:[%s0 + $0x28] sm:$0xff]
  %v26 = vld [vmem:[%s0 + $0x30] sm:$0xff]
  %v27 = vld [vmem:[%s0 + $0x38] sm:$0xff]
  %v28 = vlaneseq
  %v29 = vand.u32 %v28, 127
  %30 = vset.pattern.permute.xlu0 0
  %31 = vperm.xlu0 %30, %v20
  %v32 = vpop.permute.xlu0 %31
  %33 = vset.pattern.permute.xlu0 0
  %34 = vperm.xlu0 %33, %v21
  %v35 = vpop.permute.xlu0 %34
  %36 = vset.pattern.permute.xlu0 0
  %37 = vperm.xlu0 %36, %v22
  %v38 = vpop.permute.xlu0 %37
  %39 = vset.pattern.permute.xlu0 0
  %40 = vperm.xlu0 %39, %v23
  %v41 = vpop.permute.xlu0 %40
  %42 = vset.pattern.permute.xlu0 0
  %43 = vperm.xlu0 %42, %v24
  %v44 = vpop.permute.xlu0 %43
  %45 = vset.pattern.permute.xlu0 0
  %46 = vperm.xlu0 %45, %v25
  %v47 = vpop.permute.xlu0 %46
  %48 = vset.pattern.permute.xlu0 0
  %49 = vperm.xlu0 %48, %v26
  %v50 = vpop.permute.xlu0 %49
  %51 = vset.pattern.permute.xlu0 0
  %52 = vperm.xlu0 %51, %v27
  %v53 = vpop.permute.xlu0 %52
  %vm54 = vcmp.eq.s32.totalorder %v29, %v32
  %vm55 = vcmp.eq.s32.totalorder %v29, %v35
  %vm56 = vcmp.eq.s32.totalorder %v29, %v38
  %vm57 = vcmp.eq.s32.totalorder %v29, %v41
  %vm58 = vcmp.eq.s32.totalorder %v29, %v44
  %vm59 = vcmp.eq.s32.totalorder %v29, %v47
  %vm60 = vcmp.eq.s32.totalorder %v29, %v50
  %vm61 = vcmp.eq.s32.totalorder %v29, %v53
  %62 = vset.pattern.permute.xlu0 1
  %63 = vperm.xlu0 %62, %v20
  %v64 = vpop.permute.xlu0 %63
  %65 = vset.pattern.permute.xlu0 1
  %66 = vperm.xlu0 %65, %v21
  %v67 = vpop.permute.xlu0 %66
  %68 = vset.pattern.permute.xlu0 1
  %69 = vperm.xlu0 %68, %v22
  %v70 = vpop.permute.xlu0 %69
  %71 = vset.pattern.permute.xlu0 1
  %72 = vperm.xlu0 %71, %v23
  %v73 = vpop.permute.xlu0 %72
  %74 = vset.pattern.permute.xlu0 1
  %75 = vperm.xlu0 %74, %v24
  %v76 = vpop.permute.xlu0 %75
  %77 = vset.pattern.permute.xlu0 1
  %78 = vperm.xlu0 %77, %v25
  %v79 = vpop.permute.xlu0 %78
  %80 = vset.pattern.permute.xlu0 1
  %81 = vperm.xlu0 %80, %v26
  %v82 = vpop.permute.xlu0 %81
  %83 = vset.pattern.permute.xlu0 1
  %84 = vperm.xlu0 %83, %v27
  %v85 = vpop.permute.xlu0 %84
  %vm86 = vcmp.eq.s32.totalorder %v29, %v64
  %vm87 = vcmp.eq.s32.totalorder %v29, %v67
  %vm88 = vcmp.eq.s32.totalorder %v29, %v70
  %vm89 = vcmp.eq.s32.totalorder %v29, %v73
  %vm90 = vcmp.eq.s32.totalorder %v29, %v76
  %vm91 = vcmp.eq.s32.totalorder %v29, %v79
  %vm92 = vcmp.eq.s32.totalorder %v29, %v82
  %vm93 = vcmp.eq.s32.totalorder %v29, %v85
  %vm94 = vmor %vm54, %vm86
  %vm95 = vmor %vm55, %vm87
  %vm96 = vmor %vm56, %vm88
  %vm97 = vmor %vm57, %vm89
  %vm98 = vmor %vm58, %vm90
  %vm99 = vmor %vm59, %vm91
  %vm100 = vmor %vm60, %vm92
  %vm101 = vmor %vm61, %vm93
  %102 = vset.pattern.permute.xlu0 2
  %103 = vperm.xlu0 %102, %v20
  %v104 = vpop.permute.xlu0 %103
  %105 = vset.pattern.permute.xlu0 2
  %106 = vperm.xlu0 %105, %v21
  %v107 = vpop.permute.xlu0 %106
  %108 = vset.pattern.permute.xlu0 2
  %109 = vperm.xlu0 %108, %v22
  %v110 = vpop.permute.xlu0 %109
  %111 = vset.pattern.permute.xlu0 2
  %112 = vperm.xlu0 %111, %v23
  %v113 = vpop.permute.xlu0 %112
  %114 = vset.pattern.permute.xlu0 2
  %115 = vperm.xlu0 %114, %v24
  %v116 = vpop.permute.xlu0 %115
  %117 = vset.pattern.permute.xlu0 2
  %118 = vperm.xlu0 %117, %v25
  %v119 = vpop.permute.xlu0 %118
  %120 = vset.pattern.permute.xlu0 2
  %121 = vperm.xlu0 %120, %v26
  %v122 = vpop.permute.xlu0 %121
  %123 = vset.pattern.permute.xlu0 2
  %124 = vperm.xlu0 %123, %v27
  %v125 = vpop.permute.xlu0 %124
  %vm126 = vcmp.eq.s32.totalorder %v29, %v104
  %vm127 = vcmp.eq.s32.totalorder %v29, %v107
  %vm128 = vcmp.eq.s32.totalorder %v29, %v110
  %vm129 = vcmp.eq.s32.totalorder %v29, %v113
  %vm130 = vcmp.eq.s32.totalorder %v29, %v116
  %vm131 = vcmp.eq.s32.totalorder %v29, %v119
  %vm132 = vcmp.eq.s32.totalorder %v29, %v122
  %vm133 = vcmp.eq.s32.totalorder %v29, %v125
  %vm134 = vmor %vm94, %vm126
  %vm135 = vmor %vm95, %vm127
  %vm136 = vmor %vm96, %vm128
  %vm137 = vmor %vm97, %vm129
  %vm138 = vmor %vm98, %vm130
  %vm139 = vmor %vm99, %vm131
  %vm140 = vmor %vm100, %vm132
  %vm141 = vmor %vm101, %vm133
  %vm142 = vcmp.eq.s32.totalorder %v29, 76
  %vm143 = vmor %vm134, %vm142
  %vm144 = vmor %vm135, %vm142
  %vm145 = vmor %vm136, %vm142
  %vm146 = vmor %vm137, %vm142
  %vm147 = vmor %vm138, %vm142
  %vm148 = vmor %vm139, %vm142
  %vm149 = vmor %vm140, %vm142
  %vm150 = vmor %vm141, %vm142
  %v151 = vsel %vm143, 1, 0
  %v152 = vsel %vm144, 1, 0
  %v153 = vsel %vm145, 1, 0
  %v154 = vsel %vm146, 1, 0
  %v155 = vsel %vm147, 1, 0
  %v156 = vsel %vm148, 1, 0
  %v157 = vsel %vm149, 1, 0
  %v158 = vsel %vm150, 1, 0
  %v159 = vcvt.s32.f32 %v151
  %v160 = vcvt.s32.f32 %v152
  %v161 = vcvt.s32.f32 %v153
  %v162 = vcvt.s32.f32 %v154
  %v163 = vcvt.s32.f32 %v155
  %v164 = vcvt.s32.f32 %v156
  %v165 = vcvt.s32.f32 %v157
  %v166 = vcvt.s32.f32 %v158
  %v167 = vld [vmem:[%s1] sm:$0xff]
  %v168 = vld [vmem:[%s1 + $0x8] sm:$0xff]
  %v169 = vld [vmem:[%s1 + $0x10] sm:$0xff]
  %v170 = vld [vmem:[%s1 + $0x18] sm:$0xff]
  %v171 = vld [vmem:[%s1 + $0x20] sm:$0xff]
  %v172 = vld [vmem:[%s1 + $0x28] sm:$0xff]
  %v173 = vld [vmem:[%s1 + $0x30] sm:$0xff]
  %v174 = vld [vmem:[%s1 + $0x38] sm:$0xff]
  %v175 = vld [vmem:[%s1 + $0x40] sm:$0xff]
  %v176 = vld [vmem:[%s1 + $0x48] sm:$0xff]
  %v177 = vld [vmem:[%s1 + $0x50] sm:$0xff]
  %v178 = vld [vmem:[%s1 + $0x58] sm:$0xff]
  %v179 = vld [vmem:[%s1 + $0x60] sm:$0xff]
  %v180 = vld [vmem:[%s1 + $0x68] sm:$0xff]
  %v181 = vld [vmem:[%s1 + $0x70] sm:$0xff]
  %v182 = vld [vmem:[%s1 + $0x78] sm:$0xff]
  %183 = vmatpush.msra.mxu0 %v182
  %184 = vmatpush.msra.mxu0 %v181
  %185 = vmatpush.msra.mxu0 %v180
  %186 = vmatpush.msra.mxu0 %v179
  %187 = vmatpush.msra.mxu0 %v178
  %188 = vmatpush.msra.mxu0 %v177
  %189 = vmatpush.msra.mxu0 %v176
  %190 = vmatpush.msra.mxu0 %v175
  %191 = vmatpush.msra.mxu0 %v174
  %192 = vmatpush.msra.mxu0 %v173
  %193 = vmatpush.msra.mxu0 %v172
  %194 = vmatpush.msra.mxu0 %v171
  %195 = vmatpush.msra.mxu0 %v170
  %196 = vmatpush.msra.mxu0 %v169
  %197 = vmatpush.msra.mxu0 %v168
  %198 = vmatpush.msra.mxu0 %v167
  %199 = vmatmul.f32.gmra.mxu0 %v159
  %v200 = vpop.f32.mrf.mxu0
  %v201 = vadd.f32 0.0, %v200
  %202 = vmatmul.f32.gmra.mxu0 %v160
  %v203 = vpop.f32.mrf.mxu0
  %v204 = vadd.f32 0.0, %v203
  %205 = vmatmul.f32.gmra.mxu0 %v161
  %v206 = vpop.f32.mrf.mxu0
  %v207 = vadd.f32 0.0, %v206
  %208 = vmatmul.f32.gmra.mxu0 %v162
  %v209 = vpop.f32.mrf.mxu0
  %v210 = vadd.f32 0.0, %v209
  %211 = vmatmul.f32.gmra.mxu0 %v163
  %v212 = vpop.f32.mrf.mxu0
  %v213 = vadd.f32 0.0, %v212
  %214 = vmatmul.f32.gmra.mxu0 %v164
  %v215 = vpop.f32.mrf.mxu0
  %v216 = vadd.f32 0.0, %v215
  %217 = vmatmul.f32.gmra.mxu0 %v165
  %v218 = vpop.f32.mrf.mxu0
  %v219 = vadd.f32 0.0, %v218
  %220 = vmatmul.f32.gmra.mxu0 %v166
  %v221 = vpop.f32.mrf.mxu0
  %v222 = vadd.f32 0.0, %v221
  %223 = vdwg.mxu0
  %v224 = vld [vmem:[%s2] sm:$0xff]
  %v225 = vld [vmem:[%s2 + $0x8] sm:$0xff]
  %v226 = vld [vmem:[%s2 + $0x10] sm:$0xff]
  %v227 = vld [vmem:[%s2 + $0x18] sm:$0xff]
  %v228 = vld [vmem:[%s2 + $0x20] sm:$0xff]
  %v229 = vld [vmem:[%s2 + $0x28] sm:$0xff]
  %v230 = vld [vmem:[%s2 + $0x30] sm:$0xff]
  %v231 = vld [vmem:[%s2 + $0x38] sm:$0xff]
  %233 = vset.pattern.permute.xlu0 0
  %234 = vperm.xlu0 %233, %v224
  %v235 = vpop.permute.xlu0 %234
  %238 = vset.pattern.permute.xlu0 0
  %239 = vperm.xlu0 %238, %v225
  %v240 = vpop.permute.xlu0 %239
  %243 = vset.pattern.permute.xlu0 0
  %244 = vperm.xlu0 %243, %v226
  %v245 = vpop.permute.xlu0 %244
  %248 = vset.pattern.permute.xlu0 0
  %249 = vperm.xlu0 %248, %v227
  %v250 = vpop.permute.xlu0 %249
  %253 = vset.pattern.permute.xlu0 0
  %254 = vperm.xlu0 %253, %v228
  %v255 = vpop.permute.xlu0 %254
  %258 = vset.pattern.permute.xlu0 0
  %259 = vperm.xlu0 %258, %v229
  %v260 = vpop.permute.xlu0 %259
  %263 = vset.pattern.permute.xlu0 0
  %264 = vperm.xlu0 %263, %v230
  %v265 = vpop.permute.xlu0 %264
  %268 = vset.pattern.permute.xlu0 0
  %269 = vperm.xlu0 %268, %v231
  %v270 = vpop.permute.xlu0 %269
  %v272 = vmul.f32 %v201, %v235
  %v273 = vmul.f32 %v204, %v240
  %v274 = vmul.f32 %v207, %v245
  %v275 = vmul.f32 %v210, %v250
  %v276 = vmul.f32 %v213, %v255
  %v277 = vmul.f32 %v216, %v260
  %v278 = vmul.f32 %v219, %v265
  %v279 = vmul.f32 %v222, %v270
  %280 = vset.pattern.permute.xlu0 1
  %281 = vperm.xlu0 %280, %v224
  %v282 = vpop.permute.xlu0 %281
  %284 = vset.pattern.permute.xlu0 1
  %285 = vperm.xlu0 %284, %v225
  %v286 = vpop.permute.xlu0 %285
  %288 = vset.pattern.permute.xlu0 1
  %289 = vperm.xlu0 %288, %v226
  %v290 = vpop.permute.xlu0 %289
  %292 = vset.pattern.permute.xlu0 1
  %293 = vperm.xlu0 %292, %v227
  %v294 = vpop.permute.xlu0 %293
  %296 = vset.pattern.permute.xlu0 1
  %297 = vperm.xlu0 %296, %v228
  %v298 = vpop.permute.xlu0 %297
  %300 = vset.pattern.permute.xlu0 1
  %301 = vperm.xlu0 %300, %v229
  %v302 = vpop.permute.xlu0 %301
  %304 = vset.pattern.permute.xlu0 1
  %305 = vperm.xlu0 %304, %v230
  %v306 = vpop.permute.xlu0 %305
  %308 = vset.pattern.permute.xlu0 1
  %309 = vperm.xlu0 %308, %v231
  %v310 = vpop.permute.xlu0 %309
  %v312 = vadd.f32 %v272, %v282
  %v313 = vadd.f32 %v273, %v286
  %v314 = vadd.f32 %v274, %v290
  %v315 = vadd.f32 %v275, %v294
  %v316 = vadd.f32 %v276, %v298
  %v317 = vadd.f32 %v277, %v302
  %v318 = vadd.f32 %v278, %v306
  %v319 = vadd.f32 %v279, %v310
  %v320 = vmax.f32 %v312, 0.0
  %v321 = vmax.f32 %v313, 0.0
  %v322 = vmax.f32 %v314, 0.0
  %v323 = vmax.f32 %v315, 0.0
  %v324 = vmax.f32 %v316, 0.0
  %v325 = vmax.f32 %v317, 0.0
  %v326 = vmax.f32 %v318, 0.0
  %v327 = vmax.f32 %v319, 0.0
  %v328 = vld [vmem:[%s3] sm:$0xff]
  %v329 = vld [vmem:[%s3 + $0x8] sm:$0xff]
  %v330 = vld [vmem:[%s3 + $0x10] sm:$0xff]
  %v331 = vld [vmem:[%s3 + $0x18] sm:$0xff]
  %v332 = vld [vmem:[%s3 + $0x20] sm:$0xff]
  %v333 = vld [vmem:[%s3 + $0x28] sm:$0xff]
  %v334 = vld [vmem:[%s3 + $0x30] sm:$0xff]
  %v335 = vld [vmem:[%s3 + $0x38] sm:$0xff]
  %v336 = vld [vmem:[%s3 + $0x40] sm:$0x1]
  %v337 = vperm.slane %v336, 0
  %vm338 = vcmask 261120
  %v340 = vsel %vm338, %v320, 0
  %v343 = vsel %vm338, %v321, 0
  %v346 = vsel %vm338, %v322, 0
  %v349 = vsel %vm338, %v323, 0
  %v352 = vsel %vm338, %v324, 0
  %v355 = vsel %vm338, %v325, 0
  %v358 = vsel %vm338, %v326, 0
  %v361 = vsel %vm338, %v327, 0
  %363 = vmatpush.msra.mxu0 0.0
  %364 = vmatpush.msra.mxu0 0.0
  %365 = vmatpush.msra.mxu0 0.0
  %366 = vmatpush.msra.mxu0 0.0
  %367 = vmatpush.msra.mxu0 0.0
  %368 = vmatpush.msra.mxu0 0.0
  %369 = vmatpush.msra.mxu0 0.0
  %370 = vmatpush.msra.mxu0 0.0
  %371 = vmatpush.msra.mxu0 0.0
  %372 = vmatpush.msra.mxu0 0.0
  %373 = vmatpush.msra.mxu0 0.0
  %374 = vmatpush.msra.mxu0 0.0
  %375 = vmatpush.msra.mxu0 %v331
  %376 = vmatpush.msra.mxu0 %v330
  %377 = vmatpush.msra.mxu0 %v329
  %378 = vmatpush.msra.mxu0 %v328
  %379 = vmatmul.f32.gmra.mxu0 %v340
  %v380 = vpop.f32.mrf.mxu0
  %v381 = vadd.f32 %v337, %v380
  %382 = vmatmul.f32.gmra.mxu0 %v343
  %v383 = vpop.f32.mrf.mxu0
  %v384 = vadd.f32 %v337, %v383
  %385 = vmatmul.f32.gmra.mxu0 %v346
  %v386 = vpop.f32.mrf.mxu0
  %v387 = vadd.f32 %v337, %v386
  %388 = vmatmul.f32.gmra.mxu0 %v349
  %v389 = vpop.f32.mrf.mxu0
  %v390 = vadd.f32 %v337, %v389
  %391 = vmatmul.f32.gmra.mxu0 %v352
  %v392 = vpop.f32.mrf.mxu0
  %v393 = vadd.f32 %v337, %v392
  %394 = vmatmul.f32.gmra.mxu0 %v355
  %v395 = vpop.f32.mrf.mxu0
  %v396 = vadd.f32 %v337, %v395
  %397 = vmatmul.f32.gmra.mxu0 %v358
  %v398 = vpop.f32.mrf.mxu0
  %v399 = vadd.f32 %v337, %v398
  %400 = vmatmul.f32.gmra.mxu0 %v361
  %v401 = vpop.f32.mrf.mxu0
  %v402 = vadd.f32 %v337, %v401
  %403 = vdwg.mxu0
  %v404 = vxor.u32 %v381, 2147483648
  %v405 = vmul.f32 %v404, 1.442695
  %v406 = vpow.pop %v405
  %v407 = vadd.f32 %v406, 1.0
  %v408 = vrcp.pop %v407
  %v409 = vmul.f32 %v407, %v408
  %v410 = vsub.f32 1.0, %v409
  %v411 = vmul.f32 %v408, %v410
  %v412 = vadd.f32 %v408, %v411
  %vm413 = vweird.f32 %v407
  %vm414 = vweird.f32 %v408
  %vm415 = vmor %vm413, %vm414
  %v416 = vsel %vm415, %v408, %v412
  %v417 = vand.u32 2147483647, %v407
  %vm418 = vcmp.eq.f32.partialorder %v417, 8.507059e+37
  %v419 = vand.u32 %v407, 2147483648
  %v420 = vor.u32 1.1754944e-38, %v419
  %v421 = vsel %vm418, %v420, %v416
  %v422 = vmul.f32 1.0, %v421
  %v423 = vtanh.pop %v381
  %v424 = vmul.f32 %v422, 0.0
  %426 = vrot.lane.b32.xlu0 %v423, 64
  %v427 = vpop.permute.xlu0 %426
  %v429 = vmul.f32 %v422, %v427
  %431 = vrot.lane.b32.xlu0 %v429, 32
  %v432 = vpop.permute.xlu0 %431
  %v434 = vadd.f32 %v424, %v432
  %v435 = vtanh.pop %v434
  %437 = vrot.lane.b32.xlu0 %v435, 64
  %v438 = vpop.permute.xlu0 %437
  %v440 = vmul.f32 %v422, %v438
  %442 = vrot.lane.b32.xlu0 %v440, 32
  %v443 = vpop.permute.xlu0 %442
  %v444 = vsel %vm338, %v443, 0
  %446 = vmatpush.msra.mxu0 0.0
  %447 = vmatpush.msra.mxu0 0.0
  %448 = vmatpush.msra.mxu0 0.0
  %449 = vmatpush.msra.mxu0 0.0
  %450 = vmatpush.msra.mxu0 0.0
  %451 = vmatpush.msra.mxu0 0.0
  %452 = vmatpush.msra.mxu0 0.0
  %453 = vmatpush.msra.mxu0 0.0
  %454 = vmatpush.msra.mxu0 0.0
  %455 = vmatpush.msra.mxu0 0.0
  %456 = vmatpush.msra.mxu0 0.0
  %457 = vmatpush.msra.mxu0 0.0
  %458 = vmatpush.msra.mxu0 %v335
  %459 = vmatpush.msra.mxu0 %v334
  %460 = vmatpush.msra.mxu0 %v333
  %461 = vmatpush.msra.mxu0 %v332
  %462 = vmatmul.f32.gmra.mxu0 %v444
  %v463 = vpop.f32.mrf.mxu0
  %v464 = vadd.f32 0.0, %v463
  %465 = vdwg.mxu0
  %v466 = vadd.f32 %v384, %v464
  %v467 = vxor.u32 %v466, 2147483648
  %v468 = vmul.f32 %v467, 1.442695
  %v469 = vpow.pop %v468
  %v470 = vadd.f32 %v469, 1.0
  %v471 = vrcp.pop %v470
  %v472 = vmul.f32 %v470, %v471
  %v473 = vsub.f32 1.0, %v472
  %v474 = vmul.f32 %v471, %v473
  %v475 = vadd.f32 %v471, %v474
  %vm476 = vweird.f32 %v470
  %vm477 = vweird.f32 %v471
  %vm478 = vmor %vm476, %vm477
  %v479 = vsel %vm478, %v471, %v475
  %v480 = vand.u32 2147483647, %v470
  %vm481 = vcmp.eq.f32.partialorder %v480, 8.507059e+37
  %v482 = vand.u32 %v470, 2147483648
  %v483 = vor.u32 1.1754944e-38, %v482
  %v484 = vsel %vm481, %v483, %v479
  %v485 = vmul.f32 1.0, %v484
  %v486 = vtanh.pop %v466
  %v487 = vmul.f32 %v485, %v434
  %489 = vrot.lane.b32.xlu0 %v486, 64
  %v490 = vpop.permute.xlu0 %489
  %v492 = vmul.f32 %v485, %v490
  %494 = vrot.lane.b32.xlu0 %v492, 32
  %v495 = vpop.permute.xlu0 %494
  %v497 = vadd.f32 %v487, %v495
  %v498 = vtanh.pop %v497
  %500 = vrot.lane.b32.xlu0 %v498, 64
  %v501 = vpop.permute.xlu0 %500
  %v503 = vmul.f32 %v485, %v501
  %505 = vrot.lane.b32.xlu0 %v503, 32
  %v506 = vpop.permute.xlu0 %505
  %v507 = vsel %vm338, %v506, 0
  %509 = vmatpush.msra.mxu0 0.0
  %510 = vmatpush.msra.mxu0 0.0
  %511 = vmatpush.msra.mxu0 0.0
  %512 = vmatpush.msra.mxu0 0.0
  %513 = vmatpush.msra.mxu0 0.0
  %514 = vmatpush.msra.mxu0 0.0
  %515 = vmatpush.msra.mxu0 0.0
  %516 = vmatpush.msra.mxu0 0.0
  %517 = vmatpush.msra.mxu0 0.0
  %518 = vmatpush.msra.mxu0 0.0
  %519 = vmatpush.msra.mxu0 0.0
  %520 = vmatpush.msra.mxu0 0.0
  %521 = vmatpush.msra.mxu0 %v335
  %522 = vmatpush.msra.mxu0 %v334
  %523 = vmatpush.msra.mxu0 %v333
  %524 = vmatpush.msra.mxu0 %v332
  %525 = vmatmul.f32.gmra.mxu0 %v507
  %v526 = vpop.f32.mrf.mxu0
  %v527 = vadd.f32 0.0, %v526
  %528 = vdwg.mxu0
  %v529 = vadd.f32 %v387, %v527
  %v530 = vxor.u32 %v529, 2147483648
  %v531 = vmul.f32 %v530, 1.442695
  %v532 = vpow.pop %v531
  %v533 = vadd.f32 %v532, 1.0
  %v534 = vrcp.pop %v533
  %v535 = vmul.f32 %v533, %v534
  %v536 = vsub.f32 1.0, %v535
  %v537 = vmul.f32 %v534, %v536
  %v538 = vadd.f32 %v534, %v537
  %vm539 = vweird.f32 %v533
  %vm540 = vweird.f32 %v534
  %vm541 = vmor %vm539, %vm540
  %v542 = vsel %vm541, %v534, %v538
  %v543 = vand.u32 2147483647, %v533
  %vm544 = vcmp.eq.f32.partialorder %v543, 8.507059e+37
  %v545 = vand.u32 %v533, 2147483648
  %v546 = vor.u32 1.1754944e-38, %v545
  %v547 = vsel %vm544, %v546, %v542
  %v548 = vmul.f32 1.0, %v547
  %v549 = vtanh.pop %v529
  %v550 = vmul.f32 %v548, %v497
  %552 = vrot.lane.b32.xlu0 %v549, 64
  %v553 = vpop.permute.xlu0 %552
  %v555 = vmul.f32 %v548, %v553
  %557 = vrot.lane.b32.xlu0 %v555, 32
  %v558 = vpop.permute.xlu0 %557
  %v560 = vadd.f32 %v550, %v558
  %v561 = vtanh.pop %v560
  %563 = vrot.lane.b32.xlu0 %v561, 64
  %v564 = vpop.permute.xlu0 %563
  %v566 = vmul.f32 %v548, %v564
  %568 = vrot.lane.b32.xlu0 %v566, 32
  %v569 = vpop.permute.xlu0 %568
  %v570 = vsel %vm338, %v569, 0
  %572 = vmatpush.msra.mxu0 0.0
  %573 = vmatpush.msra.mxu0 0.0
  %574 = vmatpush.msra.mxu0 0.0
  %575 = vmatpush.msra.mxu0 0.0
  %576 = vmatpush.msra.mxu0 0.0
  %577 = vmatpush.msra.mxu0 0.0
  %578 = vmatpush.msra.mxu0 0.0
  %579 = vmatpush.msra.mxu0 0.0
  %580 = vmatpush.msra.mxu0 0.0
  %581 = vmatpush.msra.mxu0 0.0
  %582 = vmatpush.msra.mxu0 0.0
  %583 = vmatpush.msra.mxu0 0.0
  %584 = vmatpush.msra.mxu0 %v335
  %585 = vmatpush.msra.mxu0 %v334
  %586 = vmatpush.msra.mxu0 %v333
  %587 = vmatpush.msra.mxu0 %v332
  %588 = vmatmul.f32.gmra.mxu0 %v570
  %v589 = vpop.f32.mrf.mxu0
  %v590 = vadd.f32 0.0, %v589
  %591 = vdwg.mxu0
  %v592 = vadd.f32 %v390, %v590
  %v593 = vxor.u32 %v592, 2147483648
  %v594 = vmul.f32 %v593, 1.442695
  %v595 = vpow.pop %v594
  %v596 = vadd.f32 %v595, 1.0
  %v597 = vrcp.pop %v596
  %v598 = vmul.f32 %v596, %v597
  %v599 = vsub.f32 1.0, %v598
  %v600 = vmul.f32 %v597, %v599
  %v601 = vadd.f32 %v597, %v600
  %vm602 = vweird.f32 %v596
  %vm603 = vweird.f32 %v597
  %vm604 = vmor %vm602, %vm603
  %v605 = vsel %vm604, %v597, %v601
  %v606 = vand.u32 2147483647, %v596
  %vm607 = vcmp.eq.f32.partialorder %v606, 8.507059e+37
  %v608 = vand.u32 %v596, 2147483648
  %v609 = vor.u32 1.1754944e-38, %v608
  %v610 = vsel %vm607, %v609, %v605
  %v611 = vmul.f32 1.0, %v610
  %v612 = vtanh.pop %v592
  %v613 = vmul.f32 %v611, %v560
  %615 = vrot.lane.b32.xlu0 %v612, 64
  %v616 = vpop.permute.xlu0 %615
  %v618 = vmul.f32 %v611, %v616
  %620 = vrot.lane.b32.xlu0 %v618, 32
  %v621 = vpop.permute.xlu0 %620
  %v623 = vadd.f32 %v613, %v621
  %v624 = vtanh.pop %v623
  %626 = vrot.lane.b32.xlu0 %v624, 64
  %v627 = vpop.permute.xlu0 %626
  %v629 = vmul.f32 %v611, %v627
  %631 = vrot.lane.b32.xlu0 %v629, 32
  %v632 = vpop.permute.xlu0 %631
  %v633 = vsel %vm338, %v632, 0
  %635 = vmatpush.msra.mxu0 0.0
  %636 = vmatpush.msra.mxu0 0.0
  %637 = vmatpush.msra.mxu0 0.0
  %638 = vmatpush.msra.mxu0 0.0
  %639 = vmatpush.msra.mxu0 0.0
  %640 = vmatpush.msra.mxu0 0.0
  %641 = vmatpush.msra.mxu0 0.0
  %642 = vmatpush.msra.mxu0 0.0
  %643 = vmatpush.msra.mxu0 0.0
  %644 = vmatpush.msra.mxu0 0.0
  %645 = vmatpush.msra.mxu0 0.0
  %646 = vmatpush.msra.mxu0 0.0
  %647 = vmatpush.msra.mxu0 %v335
  %648 = vmatpush.msra.mxu0 %v334
  %649 = vmatpush.msra.mxu0 %v333
  %650 = vmatpush.msra.mxu0 %v332
  %651 = vmatmul.f32.gmra.mxu0 %v633
  %v652 = vpop.f32.mrf.mxu0
  %v653 = vadd.f32 0.0, %v652
  %654 = vdwg.mxu0
  %v655 = vadd.f32 %v393, %v653
  %v656 = vxor.u32 %v655, 2147483648
  %v657 = vmul.f32 %v656, 1.442695
  %v658 = vpow.pop %v657
  %v659 = vadd.f32 %v658, 1.0
  %v660 = vrcp.pop %v659
  %v661 = vmul.f32 %v659, %v660
  %v662 = vsub.f32 1.0, %v661
  %v663 = vmul.f32 %v660, %v662
  %v664 = vadd.f32 %v660, %v663
  %vm665 = vweird.f32 %v659
  %vm666 = vweird.f32 %v660
  %vm667 = vmor %vm665, %vm666
  %v668 = vsel %vm667, %v660, %v664
  %v669 = vand.u32 2147483647, %v659
  %vm670 = vcmp.eq.f32.partialorder %v669, 8.507059e+37
  %v671 = vand.u32 %v659, 2147483648
  %v672 = vor.u32 1.1754944e-38, %v671
  %v673 = vsel %vm670, %v672, %v668
  %v674 = vmul.f32 1.0, %v673
  %v675 = vtanh.pop %v655
  %v676 = vmul.f32 %v674, %v623
  %678 = vrot.lane.b32.xlu0 %v675, 64
  %v679 = vpop.permute.xlu0 %678
  %v681 = vmul.f32 %v674, %v679
  %683 = vrot.lane.b32.xlu0 %v681, 32
  %v684 = vpop.permute.xlu0 %683
  %v686 = vadd.f32 %v676, %v684
  %v687 = vtanh.pop %v686
  %689 = vrot.lane.b32.xlu0 %v687, 64
  %v690 = vpop.permute.xlu0 %689
  %v692 = vmul.f32 %v674, %v690
  %694 = vrot.lane.b32.xlu0 %v692, 32
  %v695 = vpop.permute.xlu0 %694
  %v696 = vsel %vm338, %v695, 0
  %698 = vmatpush.msra.mxu0 0.0
  %699 = vmatpush.msra.mxu0 0.0
  %700 = vmatpush.msra.mxu0 0.0
  %701 = vmatpush.msra.mxu0 0.0
  %702 = vmatpush.msra.mxu0 0.0
  %703 = vmatpush.msra.mxu0 0.0
  %704 = vmatpush.msra.mxu0 0.0
  %705 = vmatpush.msra.mxu0 0.0
  %706 = vmatpush.msra.mxu0 0.0
  %707 = vmatpush.msra.mxu0 0.0
  %708 = vmatpush.msra.mxu0 0.0
  %709 = vmatpush.msra.mxu0 0.0
  %710 = vmatpush.msra.mxu0 %v335
  %711 = vmatpush.msra.mxu0 %v334
  %712 = vmatpush.msra.mxu0 %v333
  %713 = vmatpush.msra.mxu0 %v332
  %714 = vmatmul.f32.gmra.mxu0 %v696
  %v715 = vpop.f32.mrf.mxu0
  %v716 = vadd.f32 0.0, %v715
  %717 = vdwg.mxu0
  %v718 = vadd.f32 %v396, %v716
  %v719 = vxor.u32 %v718, 2147483648
  %v720 = vmul.f32 %v719, 1.442695
  %v721 = vpow.pop %v720
  %v722 = vadd.f32 %v721, 1.0
  %v723 = vrcp.pop %v722
  %v724 = vmul.f32 %v722, %v723
  %v725 = vsub.f32 1.0, %v724
  %v726 = vmul.f32 %v723, %v725
  %v727 = vadd.f32 %v723, %v726
  %vm728 = vweird.f32 %v722
  %vm729 = vweird.f32 %v723
  %vm730 = vmor %vm728, %vm729
  %v731 = vsel %vm730, %v723, %v727
  %v732 = vand.u32 2147483647, %v722
  %vm733 = vcmp.eq.f32.partialorder %v732, 8.507059e+37
  %v734 = vand.u32 %v722, 2147483648
  %v735 = vor.u32 1.1754944e-38, %v734
  %v736 = vsel %vm733, %v735, %v731
  %v737 = vmul.f32 1.0, %v736
  %v738 = vtanh.pop %v718
  %v739 = vmul.f32 %v737, %v686
  %741 = vrot.lane.b32.xlu0 %v738, 64
  %v742 = vpop.permute.xlu0 %741
  %v744 = vmul.f32 %v737, %v742
  %746 = vrot.lane.b32.xlu0 %v744, 32
  %v747 = vpop.permute.xlu0 %746
  %v749 = vadd.f32 %v739, %v747
  %v750 = vtanh.pop %v749
  %752 = vrot.lane.b32.xlu0 %v750, 64
  %v753 = vpop.permute.xlu0 %752
  %v755 = vmul.f32 %v737, %v753
  %757 = vrot.lane.b32.xlu0 %v755, 32
  %v758 = vpop.permute.xlu0 %757
  %v759 = vsel %vm338, %v758, 0
  %761 = vmatpush.msra.mxu0 0.0
  %762 = vmatpush.msra.mxu0 0.0
  %763 = vmatpush.msra.mxu0 0.0
  %764 = vmatpush.msra.mxu0 0.0
  %765 = vmatpush.msra.mxu0 0.0
  %766 = vmatpush.msra.mxu0 0.0
  %767 = vmatpush.msra.mxu0 0.0
  %768 = vmatpush.msra.mxu0 0.0
  %769 = vmatpush.msra.mxu0 0.0
  %770 = vmatpush.msra.mxu0 0.0
  %771 = vmatpush.msra.mxu0 0.0
  %772 = vmatpush.msra.mxu0 0.0
  %773 = vmatpush.msra.mxu0 %v335
  %774 = vmatpush.msra.mxu0 %v334
  %775 = vmatpush.msra.mxu0 %v333
  %776 = vmatpush.msra.mxu0 %v332
  %777 = vmatmul.f32.gmra.mxu0 %v759
  %v778 = vpop.f32.mrf.mxu0
  %v779 = vadd.f32 0.0, %v778
  %780 = vdwg.mxu0
  %v781 = vadd.f32 %v399, %v779
  %v782 = vxor.u32 %v781, 2147483648
  %v783 = vmul.f32 %v782, 1.442695
  %v784 = vpow.pop %v783
  %v785 = vadd.f32 %v784, 1.0
  %v786 = vrcp.pop %v785
  %v787 = vmul.f32 %v785, %v786
  %v788 = vsub.f32 1.0, %v787
  %v789 = vmul.f32 %v786, %v788
  %v790 = vadd.f32 %v786, %v789
  %vm791 = vweird.f32 %v785
  %vm792 = vweird.f32 %v786
  %vm793 = vmor %vm791, %vm792
  %v794 = vsel %vm793, %v786, %v790
  %v795 = vand.u32 2147483647, %v785
  %vm796 = vcmp.eq.f32.partialorder %v795, 8.507059e+37
  %v797 = vand.u32 %v785, 2147483648
  %v798 = vor.u32 1.1754944e-38, %v797
  %v799 = vsel %vm796, %v798, %v794
  %v800 = vmul.f32 1.0, %v799
  %v801 = vtanh.pop %v781
  %v802 = vmul.f32 %v800, %v749
  %804 = vrot.lane.b32.xlu0 %v801, 64
  %v805 = vpop.permute.xlu0 %804
  %v807 = vmul.f32 %v800, %v805
  %809 = vrot.lane.b32.xlu0 %v807, 32
  %v810 = vpop.permute.xlu0 %809
  %v812 = vadd.f32 %v802, %v810
  %v813 = vtanh.pop %v812
  %815 = vrot.lane.b32.xlu0 %v813, 64
  %v816 = vpop.permute.xlu0 %815
  %v818 = vmul.f32 %v800, %v816
  %820 = vrot.lane.b32.xlu0 %v818, 32
  %v821 = vpop.permute.xlu0 %820
  %v822 = vsel %vm338, %v821, 0
  %824 = vmatpush.msra.mxu0 0.0
  %825 = vmatpush.msra.mxu0 0.0
  %826 = vmatpush.msra.mxu0 0.0
  %827 = vmatpush.msra.mxu0 0.0
  %828 = vmatpush.msra.mxu0 0.0
  %829 = vmatpush.msra.mxu0 0.0
  %830 = vmatpush.msra.mxu0 0.0
  %831 = vmatpush.msra.mxu0 0.0
  %832 = vmatpush.msra.mxu0 0.0
  %833 = vmatpush.msra.mxu0 0.0
  %834 = vmatpush.msra.mxu0 0.0
  %835 = vmatpush.msra.mxu0 0.0
  %836 = vmatpush.msra.mxu0 %v335
  %837 = vmatpush.msra.mxu0 %v334
  %838 = vmatpush.msra.mxu0 %v333
  %839 = vmatpush.msra.mxu0 %v332
  %840 = vmatmul.f32.gmra.mxu0 %v822
  %v841 = vpop.f32.mrf.mxu0
  %v842 = vadd.f32 0.0, %v841
  %843 = vdwg.mxu0
  %v844 = vadd.f32 %v402, %v842
  %v845 = vxor.u32 %v844, 2147483648
  %v846 = vmul.f32 %v845, 1.442695
  %v847 = vpow.pop %v846
  %v848 = vadd.f32 %v847, 1.0
  %v849 = vrcp.pop %v848
  %v850 = vmul.f32 %v848, %v849
  %v851 = vsub.f32 1.0, %v850
  %v852 = vmul.f32 %v849, %v851
  %v853 = vadd.f32 %v849, %v852
  %vm854 = vweird.f32 %v848
  %vm855 = vweird.f32 %v849
  %vm856 = vmor %vm854, %vm855
  %v857 = vsel %vm856, %v849, %v853
  %v858 = vand.u32 2147483647, %v848
  %vm859 = vcmp.eq.f32.partialorder %v858, 8.507059e+37
  %v860 = vand.u32 %v848, 2147483648
  %v861 = vor.u32 1.1754944e-38, %v860
  %v862 = vsel %vm859, %v861, %v857
  %v863 = vmul.f32 1.0, %v862
  %v864 = vtanh.pop %v844
  %v865 = vmul.f32 %v863, %v812
  %867 = vrot.lane.b32.xlu0 %v864, 64
  %v868 = vpop.permute.xlu0 %867
  %v870 = vmul.f32 %v863, %v868
  %872 = vrot.lane.b32.xlu0 %v870, 32
  %v873 = vpop.permute.xlu0 %872
  %v875 = vadd.f32 %v865, %v873
  %v876 = vtanh.pop %v875
  %878 = vrot.lane.b32.xlu0 %v876, 64
  %v879 = vpop.permute.xlu0 %878
  %v881 = vmul.f32 %v863, %v879
  %s882 = scalar_lea.vmem %s3, 72
  %v883 = vld [vmem:[%s882] sm:$0xff]
  %v884 = vld [vmem:[%s882 + $0x8] sm:$0xff]
  %v885 = vld [vmem:[%s882 + $0x10] sm:$0xff]
  %v886 = vld [vmem:[%s882 + $0x18] sm:$0xff]
  %v887 = vld [vmem:[%s882 + $0x20] sm:$0xff]
  %v888 = vld [vmem:[%s882 + $0x28] sm:$0xff]
  %v889 = vld [vmem:[%s882 + $0x30] sm:$0xff]
  %v890 = vld [vmem:[%s882 + $0x38] sm:$0xff]
  %v891 = vld [vmem:[%s882 + $0x40] sm:$0x1]
  %v892 = vperm.slane %v891, 0
  %894 = vrot.lane.b32.xlu0 %v881, 32
  %v895 = vpop.permute.xlu0 %894
  %v896 = vsel %vm338, %v895, 0
  %898 = vmatpush.msra.mxu0 0.0
  %899 = vmatpush.msra.mxu0 0.0
  %900 = vmatpush.msra.mxu0 0.0
  %901 = vmatpush.msra.mxu0 0.0
  %902 = vmatpush.msra.mxu0 0.0
  %903 = vmatpush.msra.mxu0 0.0
  %904 = vmatpush.msra.mxu0 0.0
  %905 = vmatpush.msra.mxu0 0.0
  %906 = vmatpush.msra.mxu0 0.0
  %907 = vmatpush.msra.mxu0 0.0
  %908 = vmatpush.msra.mxu0 0.0
  %909 = vmatpush.msra.mxu0 0.0
  %910 = vmatpush.msra.mxu0 %v886
  %911 = vmatpush.msra.mxu0 %v885
  %912 = vmatpush.msra.mxu0 %v884
  %913 = vmatpush.msra.mxu0 %v883
  %914 = vmatmul.f32.gmra.mxu0 %v444
  %v915 = vpop.f32.mrf.mxu0
  %v916 = vadd.f32 %v892, %v915
  %917 = vmatmul.f32.gmra.mxu0 %v507
  %v918 = vpop.f32.mrf.mxu0
  %v919 = vadd.f32 %v892, %v918
  %920 = vmatmul.f32.gmra.mxu0 %v570
  %v921 = vpop.f32.mrf.mxu0
  %v922 = vadd.f32 %v892, %v921
  %923 = vmatmul.f32.gmra.mxu0 %v633
  %v924 = vpop.f32.mrf.mxu0
  %v925 = vadd.f32 %v892, %v924
  %926 = vmatmul.f32.gmra.mxu0 %v696
  %v927 = vpop.f32.mrf.mxu0
  %v928 = vadd.f32 %v892, %v927
  %929 = vmatmul.f32.gmra.mxu0 %v759
  %v930 = vpop.f32.mrf.mxu0
  %v931 = vadd.f32 %v892, %v930
  %932 = vmatmul.f32.gmra.mxu0 %v822
  %v933 = vpop.f32.mrf.mxu0
  %v934 = vadd.f32 %v892, %v933
  %935 = vmatmul.f32.gmra.mxu0 %v896
  %v936 = vpop.f32.mrf.mxu0
  %v937 = vadd.f32 %v892, %v936
  %938 = vdwg.mxu0
  %v939 = vxor.u32 %v916, 2147483648
  %v940 = vmul.f32 %v939, 1.442695
  %v941 = vpow.pop %v940
  %v942 = vadd.f32 %v941, 1.0
  %v943 = vrcp.pop %v942
  %v944 = vmul.f32 %v942, %v943
  %v945 = vsub.f32 1.0, %v944
  %v946 = vmul.f32 %v943, %v945
  %v947 = vadd.f32 %v943, %v946
  %vm948 = vweird.f32 %v942
  %vm949 = vweird.f32 %v943
  %vm950 = vmor %vm948, %vm949
  %v951 = vsel %vm950, %v943, %v947
  %v952 = vand.u32 2147483647, %v942
  %vm953 = vcmp.eq.f32.partialorder %v952, 8.507059e+37
  %v954 = vand.u32 %v942, 2147483648
  %v955 = vor.u32 1.1754944e-38, %v954
  %v956 = vsel %vm953, %v955, %v951
  %v957 = vmul.f32 1.0, %v956
  %v958 = vtanh.pop %v916
  %v959 = vmul.f32 %v957, 0.0
  %961 = vrot.lane.b32.xlu0 %v958, 64
  %v962 = vpop.permute.xlu0 %961
  %v964 = vmul.f32 %v957, %v962
  %966 = vrot.lane.b32.xlu0 %v964, 32
  %v967 = vpop.permute.xlu0 %966
  %v969 = vadd.f32 %v959, %v967
  %v970 = vtanh.pop %v969
  %972 = vrot.lane.b32.xlu0 %v970, 64
  %v973 = vpop.permute.xlu0 %972
  %v975 = vmul.f32 %v957, %v973
  %977 = vrot.lane.b32.xlu0 %v975, 32
  %v978 = vpop.permute.xlu0 %977
  %v979 = vsel %vm338, %v978, 0
  %981 = vmatpush.msra.mxu0 0.0
  %982 = vmatpush.msra.mxu0 0.0
  %983 = vmatpush.msra.mxu0 0.0
  %984 = vmatpush.msra.mxu0 0.0
  %985 = vmatpush.msra.mxu0 0.0
  %986 = vmatpush.msra.mxu0 0.0
  %987 = vmatpush.msra.mxu0 0.0
  %988 = vmatpush.msra.mxu0 0.0
  %989 = vmatpush.msra.mxu0 0.0
  %990 = vmatpush.msra.mxu0 0.0
  %991 = vmatpush.msra.mxu0 0.0
  %992 = vmatpush.msra.mxu0 0.0
  %993 = vmatpush.msra.mxu0 %v890
  %994 = vmatpush.msra.mxu0 %v889
  %995 = vmatpush.msra.mxu0 %v888
  %996 = vmatpush.msra.mxu0 %v887
  %997 = vmatmul.f32.gmra.mxu0 %v979
  %v998 = vpop.f32.mrf.mxu0
  %v999 = vadd.f32 0.0, %v998
  %1000 = vdwg.mxu0
  %v1001 = vadd.f32 %v919, %v999
  %v1002 = vxor.u32 %v1001, 2147483648
  %v1003 = vmul.f32 %v1002, 1.442695
  %v1004 = vpow.pop %v1003
  %v1005 = vadd.f32 %v1004, 1.0
  %v1006 = vrcp.pop %v1005
  %v1007 = vmul.f32 %v1005, %v1006
  %v1008 = vsub.f32 1.0, %v1007
  %v1009 = vmul.f32 %v1006, %v1008
  %v1010 = vadd.f32 %v1006, %v1009
  %vm1011 = vweird.f32 %v1005
  %vm1012 = vweird.f32 %v1006
  %vm1013 = vmor %vm1011, %vm1012
  %v1014 = vsel %vm1013, %v1006, %v1010
  %v1015 = vand.u32 2147483647, %v1005
  %vm1016 = vcmp.eq.f32.partialorder %v1015, 8.507059e+37
  %v1017 = vand.u32 %v1005, 2147483648
  %v1018 = vor.u32 1.1754944e-38, %v1017
  %v1019 = vsel %vm1016, %v1018, %v1014
  %v1020 = vmul.f32 1.0, %v1019
  %v1021 = vtanh.pop %v1001
  %v1022 = vmul.f32 %v1020, %v969
  %1024 = vrot.lane.b32.xlu0 %v1021, 64
  %v1025 = vpop.permute.xlu0 %1024
  %v1027 = vmul.f32 %v1020, %v1025
  %1029 = vrot.lane.b32.xlu0 %v1027, 32
  %v1030 = vpop.permute.xlu0 %1029
  %v1032 = vadd.f32 %v1022, %v1030
  %v1033 = vtanh.pop %v1032
  %1035 = vrot.lane.b32.xlu0 %v1033, 64
  %v1036 = vpop.permute.xlu0 %1035
  %v1038 = vmul.f32 %v1020, %v1036
  %1040 = vrot.lane.b32.xlu0 %v1038, 32
  %v1041 = vpop.permute.xlu0 %1040
  %v1042 = vsel %vm338, %v1041, 0
  %1044 = vmatpush.msra.mxu0 0.0
  %1045 = vmatpush.msra.mxu0 0.0
  %1046 = vmatpush.msra.mxu0 0.0
  %1047 = vmatpush.msra.mxu0 0.0
  %1048 = vmatpush.msra.mxu0 0.0
  %1049 = vmatpush.msra.mxu0 0.0
  %1050 = vmatpush.msra.mxu0 0.0
  %1051 = vmatpush.msra.mxu0 0.0
  %1052 = vmatpush.msra.mxu0 0.0
  %1053 = vmatpush.msra.mxu0 0.0
  %1054 = vmatpush.msra.mxu0 0.0
  %1055 = vmatpush.msra.mxu0 0.0
  %1056 = vmatpush.msra.mxu0 %v890
  %1057 = vmatpush.msra.mxu0 %v889
  %1058 = vmatpush.msra.mxu0 %v888
  %1059 = vmatpush.msra.mxu0 %v887
  %1060 = vmatmul.f32.gmra.mxu0 %v1042
  %v1061 = vpop.f32.mrf.mxu0
  %v1062 = vadd.f32 0.0, %v1061
  %1063 = vdwg.mxu0
  %v1064 = vadd.f32 %v922, %v1062
  %v1065 = vxor.u32 %v1064, 2147483648
  %v1066 = vmul.f32 %v1065, 1.442695
  %v1067 = vpow.pop %v1066
  %v1068 = vadd.f32 %v1067, 1.0
  %v1069 = vrcp.pop %v1068
  %v1070 = vmul.f32 %v1068, %v1069
  %v1071 = vsub.f32 1.0, %v1070
  %v1072 = vmul.f32 %v1069, %v1071
  %v1073 = vadd.f32 %v1069, %v1072
  %vm1074 = vweird.f32 %v1068
  %vm1075 = vweird.f32 %v1069
  %vm1076 = vmor %vm1074, %vm1075
  %v1077 = vsel %vm1076, %v1069, %v1073
  %v1078 = vand.u32 2147483647, %v1068
  %vm1079 = vcmp.eq.f32.partialorder %v1078, 8.507059e+37
  %v1080 = vand.u32 %v1068, 2147483648
  %v1081 = vor.u32 1.1754944e-38, %v1080
  %v1082 = vsel %vm1079, %v1081, %v1077
  %v1083 = vmul.f32 1.0, %v1082
  %v1084 = vtanh.pop %v1064
  %v1085 = vmul.f32 %v1083, %v1032
  %1087 = vrot.lane.b32.xlu0 %v1084, 64
  %v1088 = vpop.permute.xlu0 %1087
  %v1090 = vmul.f32 %v1083, %v1088
  %1092 = vrot.lane.b32.xlu0 %v1090, 32
  %v1093 = vpop.permute.xlu0 %1092
  %v1095 = vadd.f32 %v1085, %v1093
  %v1096 = vtanh.pop %v1095
  %1098 = vrot.lane.b32.xlu0 %v1096, 64
  %v1099 = vpop.permute.xlu0 %1098
  %v1101 = vmul.f32 %v1083, %v1099
  %1103 = vrot.lane.b32.xlu0 %v1101, 32
  %v1104 = vpop.permute.xlu0 %1103
  %v1105 = vsel %vm338, %v1104, 0
  %1107 = vmatpush.msra.mxu0 0.0
  %1108 = vmatpush.msra.mxu0 0.0
  %1109 = vmatpush.msra.mxu0 0.0
  %1110 = vmatpush.msra.mxu0 0.0
  %1111 = vmatpush.msra.mxu0 0.0
  %1112 = vmatpush.msra.mxu0 0.0
  %1113 = vmatpush.msra.mxu0 0.0
  %1114 = vmatpush.msra.mxu0 0.0
  %1115 = vmatpush.msra.mxu0 0.0
  %1116 = vmatpush.msra.mxu0 0.0
  %1117 = vmatpush.msra.mxu0 0.0
  %1118 = vmatpush.msra.mxu0 0.0
  %1119 = vmatpush.msra.mxu0 %v890
  %1120 = vmatpush.msra.mxu0 %v889
  %1121 = vmatpush.msra.mxu0 %v888
  %1122 = vmatpush.msra.mxu0 %v887
  %1123 = vmatmul.f32.gmra.mxu0 %v1105
  %v1124 = vpop.f32.mrf.mxu0
  %v1125 = vadd.f32 0.0, %v1124
  %1126 = vdwg.mxu0
  %v1127 = vadd.f32 %v925, %v1125
  %v1128 = vxor.u32 %v1127, 2147483648
  %v1129 = vmul.f32 %v1128, 1.442695
  %v1130 = vpow.pop %v1129
  %v1131 = vadd.f32 %v1130, 1.0
  %v1132 = vrcp.pop %v1131
  %v1133 = vmul.f32 %v1131, %v1132
  %v1134 = vsub.f32 1.0, %v1133
  %v1135 = vmul.f32 %v1132, %v1134
  %v1136 = vadd.f32 %v1132, %v1135
  %vm1137 = vweird.f32 %v1131
  %vm1138 = vweird.f32 %v1132
  %vm1139 = vmor %vm1137, %vm1138
  %v1140 = vsel %vm1139, %v1132, %v1136
  %v1141 = vand.u32 2147483647, %v1131
  %vm1142 = vcmp.eq.f32.partialorder %v1141, 8.507059e+37
  %v1143 = vand.u32 %v1131, 2147483648
  %v1144 = vor.u32 1.1754944e-38, %v1143
  %v1145 = vsel %vm1142, %v1144, %v1140
  %v1146 = vmul.f32 1.0, %v1145
  %v1147 = vtanh.pop %v1127
  %v1148 = vmul.f32 %v1146, %v1095
  %1150 = vrot.lane.b32.xlu0 %v1147, 64
  %v1151 = vpop.permute.xlu0 %1150
  %v1153 = vmul.f32 %v1146, %v1151
  %1155 = vrot.lane.b32.xlu0 %v1153, 32
  %v1156 = vpop.permute.xlu0 %1155
  %v1158 = vadd.f32 %v1148, %v1156
  %v1159 = vtanh.pop %v1158
  %1161 = vrot.lane.b32.xlu0 %v1159, 64
  %v1162 = vpop.permute.xlu0 %1161
  %v1164 = vmul.f32 %v1146, %v1162
  %1166 = vrot.lane.b32.xlu0 %v1164, 32
  %v1167 = vpop.permute.xlu0 %1166
  %v1168 = vsel %vm338, %v1167, 0
  %1170 = vmatpush.msra.mxu0 0.0
  %1171 = vmatpush.msra.mxu0 0.0
  %1172 = vmatpush.msra.mxu0 0.0
  %1173 = vmatpush.msra.mxu0 0.0
  %1174 = vmatpush.msra.mxu0 0.0
  %1175 = vmatpush.msra.mxu0 0.0
  %1176 = vmatpush.msra.mxu0 0.0
  %1177 = vmatpush.msra.mxu0 0.0
  %1178 = vmatpush.msra.mxu0 0.0
  %1179 = vmatpush.msra.mxu0 0.0
  %1180 = vmatpush.msra.mxu0 0.0
  %1181 = vmatpush.msra.mxu0 0.0
  %1182 = vmatpush.msra.mxu0 %v890
  %1183 = vmatpush.msra.mxu0 %v889
  %1184 = vmatpush.msra.mxu0 %v888
  %1185 = vmatpush.msra.mxu0 %v887
  %1186 = vmatmul.f32.gmra.mxu0 %v1168
  %v1187 = vpop.f32.mrf.mxu0
  %v1188 = vadd.f32 0.0, %v1187
  %1189 = vdwg.mxu0
  %v1190 = vadd.f32 %v928, %v1188
  %v1191 = vxor.u32 %v1190, 2147483648
  %v1192 = vmul.f32 %v1191, 1.442695
  %v1193 = vpow.pop %v1192
  %v1194 = vadd.f32 %v1193, 1.0
  %v1195 = vrcp.pop %v1194
  %v1196 = vmul.f32 %v1194, %v1195
  %v1197 = vsub.f32 1.0, %v1196
  %v1198 = vmul.f32 %v1195, %v1197
  %v1199 = vadd.f32 %v1195, %v1198
  %vm1200 = vweird.f32 %v1194
  %vm1201 = vweird.f32 %v1195
  %vm1202 = vmor %vm1200, %vm1201
  %v1203 = vsel %vm1202, %v1195, %v1199
  %v1204 = vand.u32 2147483647, %v1194
  %vm1205 = vcmp.eq.f32.partialorder %v1204, 8.507059e+37
  %v1206 = vand.u32 %v1194, 2147483648
  %v1207 = vor.u32 1.1754944e-38, %v1206
  %v1208 = vsel %vm1205, %v1207, %v1203
  %v1209 = vmul.f32 1.0, %v1208
  %v1210 = vtanh.pop %v1190
  %v1211 = vmul.f32 %v1209, %v1158
  %1213 = vrot.lane.b32.xlu0 %v1210, 64
  %v1214 = vpop.permute.xlu0 %1213
  %v1216 = vmul.f32 %v1209, %v1214
  %1218 = vrot.lane.b32.xlu0 %v1216, 32
  %v1219 = vpop.permute.xlu0 %1218
  %v1221 = vadd.f32 %v1211, %v1219
  %v1222 = vtanh.pop %v1221
  %1224 = vrot.lane.b32.xlu0 %v1222, 64
  %v1225 = vpop.permute.xlu0 %1224
  %v1227 = vmul.f32 %v1209, %v1225
  %1229 = vrot.lane.b32.xlu0 %v1227, 32
  %v1230 = vpop.permute.xlu0 %1229
  %v1231 = vsel %vm338, %v1230, 0
  %1233 = vmatpush.msra.mxu0 0.0
  %1234 = vmatpush.msra.mxu0 0.0
  %1235 = vmatpush.msra.mxu0 0.0
  %1236 = vmatpush.msra.mxu0 0.0
  %1237 = vmatpush.msra.mxu0 0.0
  %1238 = vmatpush.msra.mxu0 0.0
  %1239 = vmatpush.msra.mxu0 0.0
  %1240 = vmatpush.msra.mxu0 0.0
  %1241 = vmatpush.msra.mxu0 0.0
  %1242 = vmatpush.msra.mxu0 0.0
  %1243 = vmatpush.msra.mxu0 0.0
  %1244 = vmatpush.msra.mxu0 0.0
  %1245 = vmatpush.msra.mxu0 %v890
  %1246 = vmatpush.msra.mxu0 %v889
  %1247 = vmatpush.msra.mxu0 %v888
  %1248 = vmatpush.msra.mxu0 %v887
  %1249 = vmatmul.f32.gmra.mxu0 %v1231
  %v1250 = vpop.f32.mrf.mxu0
  %v1251 = vadd.f32 0.0, %v1250
  %1252 = vdwg.mxu0
  %v1253 = vadd.f32 %v931, %v1251
  %v1254 = vxor.u32 %v1253, 2147483648
  %v1255 = vmul.f32 %v1254, 1.442695
  %v1256 = vpow.pop %v1255
  %v1257 = vadd.f32 %v1256, 1.0
  %v1258 = vrcp.pop %v1257
  %v1259 = vmul.f32 %v1257, %v1258
  %v1260 = vsub.f32 1.0, %v1259
  %v1261 = vmul.f32 %v1258, %v1260
  %v1262 = vadd.f32 %v1258, %v1261
  %vm1263 = vweird.f32 %v1257
  %vm1264 = vweird.f32 %v1258
  %vm1265 = vmor %vm1263, %vm1264
  %v1266 = vsel %vm1265, %v1258, %v1262
  %v1267 = vand.u32 2147483647, %v1257
  %vm1268 = vcmp.eq.f32.partialorder %v1267, 8.507059e+37
  %v1269 = vand.u32 %v1257, 2147483648
  %v1270 = vor.u32 1.1754944e-38, %v1269
  %v1271 = vsel %vm1268, %v1270, %v1266
  %v1272 = vmul.f32 1.0, %v1271
  %v1273 = vtanh.pop %v1253
  %v1274 = vmul.f32 %v1272, %v1221
  %1276 = vrot.lane.b32.xlu0 %v1273, 64
  %v1277 = vpop.permute.xlu0 %1276
  %v1279 = vmul.f32 %v1272, %v1277
  %1281 = vrot.lane.b32.xlu0 %v1279, 32
  %v1282 = vpop.permute.xlu0 %1281
  %v1284 = vadd.f32 %v1274, %v1282
  %v1285 = vtanh.pop %v1284
  %1287 = vrot.lane.b32.xlu0 %v1285, 64
  %v1288 = vpop.permute.xlu0 %1287
  %v1290 = vmul.f32 %v1272, %v1288
  %1292 = vrot.lane.b32.xlu0 %v1290, 32
  %v1293 = vpop.permute.xlu0 %1292
  %v1294 = vsel %vm338, %v1293, 0
  %1296 = vmatpush.msra.mxu0 0.0
  %1297 = vmatpush.msra.mxu0 0.0
  %1298 = vmatpush.msra.mxu0 0.0
  %1299 = vmatpush.msra.mxu0 0.0
  %1300 = vmatpush.msra.mxu0 0.0
  %1301 = vmatpush.msra.mxu0 0.0
  %1302 = vmatpush.msra.mxu0 0.0
  %1303 = vmatpush.msra.mxu0 0.0
  %1304 = vmatpush.msra.mxu0 0.0
  %1305 = vmatpush.msra.mxu0 0.0
  %1306 = vmatpush.msra.mxu0 0.0
  %1307 = vmatpush.msra.mxu0 0.0
  %1308 = vmatpush.msra.mxu0 %v890
  %1309 = vmatpush.msra.mxu0 %v889
  %1310 = vmatpush.msra.mxu0 %v888
  %1311 = vmatpush.msra.mxu0 %v887
  %1312 = vmatmul.f32.gmra.mxu0 %v1294
  %v1313 = vpop.f32.mrf.mxu0
  %v1314 = vadd.f32 0.0, %v1313
  %1315 = vdwg.mxu0
  %v1316 = vadd.f32 %v934, %v1314
  %v1317 = vxor.u32 %v1316, 2147483648
  %v1318 = vmul.f32 %v1317, 1.442695
  %v1319 = vpow.pop %v1318
  %v1320 = vadd.f32 %v1319, 1.0
  %v1321 = vrcp.pop %v1320
  %v1322 = vmul.f32 %v1320, %v1321
  %v1323 = vsub.f32 1.0, %v1322
  %v1324 = vmul.f32 %v1321, %v1323
  %v1325 = vadd.f32 %v1321, %v1324
  %vm1326 = vweird.f32 %v1320
  %vm1327 = vweird.f32 %v1321
  %vm1328 = vmor %vm1326, %vm1327
  %v1329 = vsel %vm1328, %v1321, %v1325
  %v1330 = vand.u32 2147483647, %v1320
  %vm1331 = vcmp.eq.f32.partialorder %v1330, 8.507059e+37
  %v1332 = vand.u32 %v1320, 2147483648
  %v1333 = vor.u32 1.1754944e-38, %v1332
  %v1334 = vsel %vm1331, %v1333, %v1329
  %v1335 = vmul.f32 1.0, %v1334
  %v1336 = vtanh.pop %v1316
  %v1337 = vmul.f32 %v1335, %v1284
  %1339 = vrot.lane.b32.xlu0 %v1336, 64
  %v1340 = vpop.permute.xlu0 %1339
  %v1342 = vmul.f32 %v1335, %v1340
  %1344 = vrot.lane.b32.xlu0 %v1342, 32
  %v1345 = vpop.permute.xlu0 %1344
  %v1347 = vadd.f32 %v1337, %v1345
  %v1348 = vtanh.pop %v1347
  %1350 = vrot.lane.b32.xlu0 %v1348, 64
  %v1351 = vpop.permute.xlu0 %1350
  %v1353 = vmul.f32 %v1335, %v1351
  %1355 = vrot.lane.b32.xlu0 %v1353, 32
  %v1356 = vpop.permute.xlu0 %1355
  %v1357 = vsel %vm338, %v1356, 0
  %1359 = vmatpush.msra.mxu0 0.0
  %1360 = vmatpush.msra.mxu0 0.0
  %1361 = vmatpush.msra.mxu0 0.0
  %1362 = vmatpush.msra.mxu0 0.0
  %1363 = vmatpush.msra.mxu0 0.0
  %1364 = vmatpush.msra.mxu0 0.0
  %1365 = vmatpush.msra.mxu0 0.0
  %1366 = vmatpush.msra.mxu0 0.0
  %1367 = vmatpush.msra.mxu0 0.0
  %1368 = vmatpush.msra.mxu0 0.0
  %1369 = vmatpush.msra.mxu0 0.0
  %1370 = vmatpush.msra.mxu0 0.0
  %1371 = vmatpush.msra.mxu0 %v890
  %1372 = vmatpush.msra.mxu0 %v889
  %1373 = vmatpush.msra.mxu0 %v888
  %1374 = vmatpush.msra.mxu0 %v887
  %1375 = vmatmul.f32.gmra.mxu0 %v1357
  %v1376 = vpop.f32.mrf.mxu0
  %v1377 = vadd.f32 0.0, %v1376
  %1378 = vdwg.mxu0
  %v1379 = vadd.f32 %v937, %v1377
  %v1380 = vxor.u32 %v1379, 2147483648
  %v1381 = vmul.f32 %v1380, 1.442695
  %v1382 = vpow.pop %v1381
  %v1383 = vadd.f32 %v1382, 1.0
  %v1384 = vrcp.pop %v1383
  %v1385 = vmul.f32 %v1383, %v1384
  %v1386 = vsub.f32 1.0, %v1385
  %v1387 = vmul.f32 %v1384, %v1386
  %v1388 = vadd.f32 %v1384, %v1387
  %vm1389 = vweird.f32 %v1383
  %vm1390 = vweird.f32 %v1384
  %vm1391 = vmor %vm1389, %vm1390
  %v1392 = vsel %vm1391, %v1384, %v1388
  %v1393 = vand.u32 2147483647, %v1383
  %vm1394 = vcmp.eq.f32.partialorder %v1393, 8.507059e+37
  %v1395 = vand.u32 %v1383, 2147483648
  %v1396 = vor.u32 1.1754944e-38, %v1395
  %v1397 = vsel %vm1394, %v1396, %v1392
  %v1398 = vmul.f32 1.0, %v1397
  %v1399 = vtanh.pop %v1379
  %v1400 = vmul.f32 %v1398, %v1347
  %1402 = vrot.lane.b32.xlu0 %v1399, 64
  %v1403 = vpop.permute.xlu0 %1402
  %v1405 = vmul.f32 %v1398, %v1403
  %1407 = vrot.lane.b32.xlu0 %v1405, 32
  %v1408 = vpop.permute.xlu0 %1407
  %v1410 = vadd.f32 %v1400, %v1408
  %v1411 = vtanh.pop %v1410
  %1413 = vrot.lane.b32.xlu0 %v1411, 64
  %v1414 = vpop.permute.xlu0 %1413
  %v1416 = vmul.f32 %v1398, %v1414
  %v1417 = vld [vmem:[%s4] sm:$0xff]
  %v1418 = vld [vmem:[%s4 + $0x8] sm:$0xff]
  %v1419 = vld [vmem:[%s4 + $0x10] sm:$0xff]
  %v1420 = vld [vmem:[%s4 + $0x18] sm:$0xff]
  %v1421 = vld [vmem:[%s4 + $0x20] sm:$0x1]
  %v1422 = vld [vmem:[%s4 + $0x28] sm:$0xff]
  %v1423 = vld [vmem:[%s4 + $0x30] sm:$0xff]
  %v1424 = vld [vmem:[%s4 + $0x38] sm:$0xff]
  %v1425 = vld [vmem:[%s4 + $0x40] sm:$0xff]
  %v1426 = vld [vmem:[%s4 + $0x48] sm:$0xff]
  %v1427 = vld [vmem:[%s4 + $0x50] sm:$0xff]
  %v1428 = vld [vmem:[%s4 + $0x58] sm:$0xff]
  %v1429 = vld [vmem:[%s4 + $0x60] sm:$0xff]
  %v1430 = vld [vmem:[%s4 + $0x68] sm:$0x1]
  %v1431 = vperm.slane %v1421, 0
  %1433 = vrot.lane.b32.xlu0 %v1416, 32
  %v1434 = vpop.permute.xlu0 %1433
  %v1435 = vsel %vm338, %v1434, 0
  %1437 = vmatpush.msra.mxu0 0.0
  %1438 = vmatpush.msra.mxu0 0.0
  %1439 = vmatpush.msra.mxu0 0.0
  %1440 = vmatpush.msra.mxu0 0.0
  %1441 = vmatpush.msra.mxu0 0.0
  %1442 = vmatpush.msra.mxu0 0.0
  %1443 = vmatpush.msra.mxu0 0.0
  %1444 = vmatpush.msra.mxu0 0.0
  %1445 = vmatpush.msra.mxu0 0.0
  %1446 = vmatpush.msra.mxu0 0.0
  %1447 = vmatpush.msra.mxu0 0.0
  %1448 = vmatpush.msra.mxu0 0.0
  %1449 = vmatpush.msra.mxu0 %v1420
  %1450 = vmatpush.msra.mxu0 %v1419
  %1451 = vmatpush.msra.mxu0 %v1418
  %1452 = vmatpush.msra.mxu0 %v1417
  %1453 = vmatmul.f32.gmra.mxu0 %v979
  %v1454 = vpop.f32.mrf.mxu0
  %v1455 = vadd.f32 %v1431, %v1454
  %1456 = vmatmul.f32.gmra.mxu0 %v1042
  %v1457 = vpop.f32.mrf.mxu0
  %v1458 = vadd.f32 %v1431, %v1457
  %1459 = vmatmul.f32.gmra.mxu0 %v1105
  %v1460 = vpop.f32.mrf.mxu0
  %v1461 = vadd.f32 %v1431, %v1460
  %1462 = vmatmul.f32.gmra.mxu0 %v1168
  %v1463 = vpop.f32.mrf.mxu0
  %v1464 = vadd.f32 %v1431, %v1463
  %1465 = vmatmul.f32.gmra.mxu0 %v1231
  %v1466 = vpop.f32.mrf.mxu0
  %v1467 = vadd.f32 %v1431, %v1466
  %1468 = vmatmul.f32.gmra.mxu0 %v1294
  %v1469 = vpop.f32.mrf.mxu0
  %v1470 = vadd.f32 %v1431, %v1469
  %1471 = vmatmul.f32.gmra.mxu0 %v1357
  %v1472 = vpop.f32.mrf.mxu0
  %v1473 = vadd.f32 %v1431, %v1472
  %1474 = vmatmul.f32.gmra.mxu0 %v1435
  %v1475 = vpop.f32.mrf.mxu0
  %v1476 = vadd.f32 %v1431, %v1475
  %1477 = vdwg.mxu0
  %1478 = vset.pattern.permute.xlu0 2
  %1479 = vperm.xlu0 %1478, %v224
  %v1480 = vpop.permute.xlu0 %1479
  %1482 = vset.pattern.permute.xlu0 2
  %1483 = vperm.xlu0 %1482, %v225
  %v1484 = vpop.permute.xlu0 %1483
  %1486 = vset.pattern.permute.xlu0 2
  %1487 = vperm.xlu0 %1486, %v226
  %v1488 = vpop.permute.xlu0 %1487
  %1490 = vset.pattern.permute.xlu0 2
  %1491 = vperm.xlu0 %1490, %v227
  %v1492 = vpop.permute.xlu0 %1491
  %1494 = vset.pattern.permute.xlu0 2
  %1495 = vperm.xlu0 %1494, %v228
  %v1496 = vpop.permute.xlu0 %1495
  %1498 = vset.pattern.permute.xlu0 2
  %1499 = vperm.xlu0 %1498, %v229
  %v1500 = vpop.permute.xlu0 %1499
  %1502 = vset.pattern.permute.xlu0 2
  %1503 = vperm.xlu0 %1502, %v230
  %v1504 = vpop.permute.xlu0 %1503
  %1506 = vset.pattern.permute.xlu0 2
  %1507 = vperm.xlu0 %1506, %v231
  %v1508 = vpop.permute.xlu0 %1507
  %v1510 = vmul.f32 %v1455, %v1480
  %v1511 = vmul.f32 %v1458, %v1484
  %v1512 = vmul.f32 %v1461, %v1488
  %v1513 = vmul.f32 %v1464, %v1492
  %v1514 = vmul.f32 %v1467, %v1496
  %v1515 = vmul.f32 %v1470, %v1500
  %v1516 = vmul.f32 %v1473, %v1504
  %v1517 = vmul.f32 %v1476, %v1508
  %1518 = vset.pattern.permute.xlu0 3
  %1519 = vperm.xlu0 %1518, %v224
  %v1520 = vpop.permute.xlu0 %1519
  %1522 = vset.pattern.permute.xlu0 3
  %1523 = vperm.xlu0 %1522, %v225
  %v1524 = vpop.permute.xlu0 %1523
  %1526 = vset.pattern.permute.xlu0 3
  %1527 = vperm.xlu0 %1526, %v226
  %v1528 = vpop.permute.xlu0 %1527
  %1530 = vset.pattern.permute.xlu0 3
  %1531 = vperm.xlu0 %1530, %v227
  %v1532 = vpop.permute.xlu0 %1531
  %1534 = vset.pattern.permute.xlu0 3
  %1535 = vperm.xlu0 %1534, %v228
  %v1536 = vpop.permute.xlu0 %1535
  %1538 = vset.pattern.permute.xlu0 3
  %1539 = vperm.xlu0 %1538, %v229
  %v1540 = vpop.permute.xlu0 %1539
  %1542 = vset.pattern.permute.xlu0 3
  %1543 = vperm.xlu0 %1542, %v230
  %v1544 = vpop.permute.xlu0 %1543
  %1546 = vset.pattern.permute.xlu0 3
  %1547 = vperm.xlu0 %1546, %v231
  %v1548 = vpop.permute.xlu0 %1547
  %v1550 = vadd.f32 %v1510, %v1520
  %v1551 = vadd.f32 %v1511, %v1524
  %v1552 = vadd.f32 %v1512, %v1528
  %v1553 = vadd.f32 %v1513, %v1532
  %v1554 = vadd.f32 %v1514, %v1536
  %v1555 = vadd.f32 %v1515, %v1540
  %v1556 = vadd.f32 %v1516, %v1544
  %v1557 = vadd.f32 %v1517, %v1548
  %v1558 = vmax.f32 %v1550, 0.0
  %v1559 = vmax.f32 %v1551, 0.0
  %v1560 = vmax.f32 %v1552, 0.0
  %v1561 = vmax.f32 %v1553, 0.0
  %v1562 = vmax.f32 %v1554, 0.0
  %v1563 = vmax.f32 %v1555, 0.0
  %v1564 = vmax.f32 %v1556, 0.0
  %v1565 = vmax.f32 %v1557, 0.0
  %v1566 = vperm.slane %v1430, 0
  %vm1567 = vcmask 523264
  %v1569 = vsel %vm1567, %v1558, 0
  %v1572 = vsel %vm1567, %v1559, 0
  %v1575 = vsel %vm1567, %v1560, 0
  %v1578 = vsel %vm1567, %v1561, 0
  %v1581 = vsel %vm1567, %v1562, 0
  %v1584 = vsel %vm1567, %v1563, 0
  %v1587 = vsel %vm1567, %v1564, 0
  %v1590 = vsel %vm1567, %v1565, 0
  %1592 = vmatpush.msra.mxu0 0.0
  %1593 = vmatpush.msra.mxu0 0.0
  %1594 = vmatpush.msra.mxu0 0.0
  %1595 = vmatpush.msra.mxu0 0.0
  %1596 = vmatpush.msra.mxu0 0.0
  %1597 = vmatpush.msra.mxu0 0.0
  %1598 = vmatpush.msra.mxu0 0.0
  %1599 = vmatpush.msra.mxu0 0.0
  %1600 = vmatpush.msra.mxu0 %v1429
  %1601 = vmatpush.msra.mxu0 %v1428
  %1602 = vmatpush.msra.mxu0 %v1427
  %1603 = vmatpush.msra.mxu0 %v1426
  %1604 = vmatpush.msra.mxu0 %v1425
  %1605 = vmatpush.msra.mxu0 %v1424
  %1606 = vmatpush.msra.mxu0 %v1423
  %1607 = vmatpush.msra.mxu0 %v1422
  %1608 = vmatmul.f32.gmra.mxu0 %v1569
  %v1609 = vpop.f32.mrf.mxu0
  %v1610 = vadd.f32 %v1566, %v1609
  %1611 = vmatmul.f32.gmra.mxu0 %v1572
  %v1612 = vpop.f32.mrf.mxu0
  %v1613 = vadd.f32 %v1566, %v1612
  %1614 = vmatmul.f32.gmra.mxu0 %v1575
  %v1615 = vpop.f32.mrf.mxu0
  %v1616 = vadd.f32 %v1566, %v1615
  %1617 = vmatmul.f32.gmra.mxu0 %v1578
  %v1618 = vpop.f32.mrf.mxu0
  %v1619 = vadd.f32 %v1566, %v1618
  %1620 = vmatmul.f32.gmra.mxu0 %v1581
  %v1621 = vpop.f32.mrf.mxu0
  %v1622 = vadd.f32 %v1566, %v1621
  %1623 = vmatmul.f32.gmra.mxu0 %v1584
  %v1624 = vpop.f32.mrf.mxu0
  %v1625 = vadd.f32 %v1566, %v1624
  %1626 = vmatmul.f32.gmra.mxu0 %v1587
  %v1627 = vpop.f32.mrf.mxu0
  %v1628 = vadd.f32 %v1566, %v1627
  %1629 = vmatmul.f32.gmra.mxu0 %v1590
  %v1630 = vpop.f32.mrf.mxu0
  %v1631 = vadd.f32 %v1566, %v1630
  %1632 = vdwg.mxu0
  %vm1633 = vcmask 392192
  %v1634 = vsel %vm1633, %v1610, -inf
  %1635 = vmax.xlane.f32.xlu0 %v1634
  %v1636 = vpop.xlane.xlu0 %1635
  %v1637 = vsel %vm1633, %v1613, -inf
  %1638 = vmax.xlane.f32.xlu0 %v1637
  %v1639 = vpop.xlane.xlu0 %1638
  %v1640 = vsel %vm1633, %v1616, -inf
  %1641 = vmax.xlane.f32.xlu0 %v1640
  %v1642 = vpop.xlane.xlu0 %1641
  %v1643 = vsel %vm1633, %v1619, -inf
  %1644 = vmax.xlane.f32.xlu0 %v1643
  %v1645 = vpop.xlane.xlu0 %1644
  %v1646 = vsel %vm1633, %v1622, -inf
  %1647 = vmax.xlane.f32.xlu0 %v1646
  %v1648 = vpop.xlane.xlu0 %1647
  %v1649 = vsel %vm1633, %v1625, -inf
  %1650 = vmax.xlane.f32.xlu0 %v1649
  %v1651 = vpop.xlane.xlu0 %1650
  %v1652 = vsel %vm1633, %v1628, -inf
  %1653 = vmax.xlane.f32.xlu0 %v1652
  %v1654 = vpop.xlane.xlu0 %1653
  %v1655 = vsel %vm1633, %v1631, -inf
  %1656 = vmax.xlane.f32.xlu0 %v1655
  %v1657 = vpop.xlane.xlu0 %1656
  %v1658 = vsub.f32 %v1610, %v1636
  %v1659 = vsub.f32 %v1613, %v1639
  %v1660 = vsub.f32 %v1616, %v1642
  %v1661 = vsub.f32 %v1619, %v1645
  %v1662 = vsub.f32 %v1622, %v1648
  %v1663 = vsub.f32 %v1625, %v1651
  %v1664 = vsub.f32 %v1628, %v1654
  %v1665 = vsub.f32 %v1631, %v1657
  %v1666 = vmul.f32 %v1658, 1.442695
  %v1667 = vpow.pop %v1666
  %v1668 = vmul.f32 %v1659, 1.442695
  %v1669 = vpow.pop %v1668
  %v1670 = vmul.f32 %v1660, 1.442695
  %v1671 = vpow.pop %v1670
  %v1672 = vmul.f32 %v1661, 1.442695
  %v1673 = vpow.pop %v1672
  %v1674 = vmul.f32 %v1662, 1.442695
  %v1675 = vpow.pop %v1674
  %v1676 = vmul.f32 %v1663, 1.442695
  %v1677 = vpow.pop %v1676
  %v1678 = vmul.f32 %v1664, 1.442695
  %v1679 = vpow.pop %v1678
  %v1680 = vmul.f32 %v1665, 1.442695
  %v1681 = vpow.pop %v1680
  %v1682 = vsel %vm1633, %v1667, 0.0
  %1683 = vadd.xlane.f32.xlu0 %v1682
  %v1684 = vpop.xlane.xlu0 %1683
  %v1685 = vsel %vm1633, %v1669, 0.0
  %1686 = vadd.xlane.f32.xlu0 %v1685
  %v1687 = vpop.xlane.xlu0 %1686
  %v1688 = vsel %vm1633, %v1671, 0.0
  %1689 = vadd.xlane.f32.xlu0 %v1688
  %v1690 = vpop.xlane.xlu0 %1689
  %v1691 = vsel %vm1633, %v1673, 0.0
  %1692 = vadd.xlane.f32.xlu0 %v1691
  %v1693 = vpop.xlane.xlu0 %1692
  %v1694 = vsel %vm1633, %v1675, 0.0
  %1695 = vadd.xlane.f32.xlu0 %v1694
  %v1696 = vpop.xlane.xlu0 %1695
  %v1697 = vsel %vm1633, %v1677, 0.0
  %1698 = vadd.xlane.f32.xlu0 %v1697
  %v1699 = vpop.xlane.xlu0 %1698
  %v1700 = vsel %vm1633, %v1679, 0.0
  %1701 = vadd.xlane.f32.xlu0 %v1700
  %v1702 = vpop.xlane.xlu0 %1701
  %v1703 = vsel %vm1633, %v1681, 0.0
  %1704 = vadd.xlane.f32.xlu0 %v1703
  %v1705 = vpop.xlane.xlu0 %1704
  %v1706 = vlog2.pop %v1684
  %v1707 = vmul.f32 %v1706, 0.6931472
  %v1708 = vlog2.pop %v1687
  %v1709 = vmul.f32 %v1708, 0.6931472
  %v1710 = vlog2.pop %v1690
  %v1711 = vmul.f32 %v1710, 0.6931472
  %v1712 = vlog2.pop %v1693
  %v1713 = vmul.f32 %v1712, 0.6931472
  %v1714 = vlog2.pop %v1696
  %v1715 = vmul.f32 %v1714, 0.6931472
  %v1716 = vlog2.pop %v1699
  %v1717 = vmul.f32 %v1716, 0.6931472
  %v1718 = vlog2.pop %v1702
  %v1719 = vmul.f32 %v1718, 0.6931472
  %v1720 = vlog2.pop %v1705
  %v1721 = vmul.f32 %v1720, 0.6931472
  %v1722 = vadd.f32 %v1636, %v1707
  %v1723 = vadd.f32 %v1639, %v1709
  %v1724 = vadd.f32 %v1642, %v1711
  %v1725 = vadd.f32 %v1645, %v1713
  %v1726 = vadd.f32 %v1648, %v1715
  %v1727 = vadd.f32 %v1651, %v1717
  %v1728 = vadd.f32 %v1654, %v1719
  %v1729 = vadd.f32 %v1657, %v1721
  %v1730 = vsub.f32 %v1610, %v1722
  %v1731 = vsub.f32 %v1613, %v1723
  %v1732 = vsub.f32 %v1616, %v1724
  %v1733 = vsub.f32 %v1619, %v1725
  %v1734 = vsub.f32 %v1622, %v1726
  %v1735 = vsub.f32 %v1625, %v1727
  %v1736 = vsub.f32 %v1628, %v1728
  %v1737 = vsub.f32 %v1631, %v1729
  %1738 = vst.msk [vmem:[%s5] sm:$0xff] %vm1633, %v1730
  %1739 = vst.msk [vmem:[%s5 + $0x8] sm:$0xff] %vm1633, %v1731
  %1740 = vst.msk [vmem:[%s5 + $0x10] sm:$0xff] %vm1633, %v1732
  %1741 = vst.msk [vmem:[%s5 + $0x18] sm:$0xff] %vm1633, %v1733
  %1742 = vst.msk [vmem:[%s5 + $0x20] sm:$0xff] %vm1633, %v1734
  %1743 = vst.msk [vmem:[%s5 + $0x28] sm:$0xff] %vm1633, %v1735
  %1744 = vst.msk [vmem:[%s5 + $0x30] sm:$0xff] %vm1633, %v1736
  %1745 = vst.msk [vmem:[%s5 + $0x38] sm:$0xff] %vm1633, %v1737
  // Predicated region
  $region22: #{forward.1} parent=0 // pred_check
    _
  $region23: #{forward.1} parent=0 // pred_check_branch
    %1747 = sbr.rel (0) target = $region25
  $region24: #{forward.1} parent=0 // pred_region
    _
  $region25: #{forward.1} parent=0 // pred_fallthru
    _
  // Predicated region
  $region26: #{forward.1} parent=0 // pred_check
    _
  $region27: #{forward.1} parent=0 // pred_check_branch
    %1749 = sbr.rel (0) target = $region29
  $region28: #{forward.1} parent=0 // pred_region
    _
  $region29: #{forward.1} parent=0 // pred_fallthru
    _

</llo_original>
